<compile_context>
chip_gen: v7x
topology: tpu7x:2x2x1
jax: 0.10.0
libtpu: 0.0.40
codegen_flags: <defaults>
</compile_context>

<pallas_src>
import jax
import jax.numpy as jnp
import numpy as np
from jax.experimental import pallas as pl
from jax.experimental.pallas import tpu as pltpu

# Model hyperparameters (module defaults D=3, C=2; L=2 exercises the layer loop)
D = 3
L = 2
C = 2
B = 8  # demo batch size

# TODO(synk): noise_channels is empty by default and its channel classes were
# not provided, so noise application is not implemented. The pure-state
# optimization (tracking v instead of rho) is only valid while the evolution
# stays unitary; it must be replaced by full density-matrix updates if noise
# channels are ever added.


def _round_up(n, m):
    return ((n + m - 1) // m) * m


def _make_kernel(n_layers, n_classes, n_feat):
    assert n_feat == 3, "U3 data re-uploading layer needs exactly 3 angles"

    def kernel(x_ref, w_ref, th_ref, out_ref):
        # x_ref:   (D, 1, TILE_B)    VMEM f32, batch on lanes
        # w_ref:   (L*C*D,)          SMEM f32, flat scalar table
        # th_ref:  (L*C*D,)          SMEM f32, flat scalar table
        # out_ref: (C*8, TILE_B)     VMEM f32; rows per class =
        #          [re00, re01, re10, re11, im00, im01, im10, im11]
        x0 = x_ref[0]  # (1, TILE_B)
        x1 = x_ref[1]
        x2 = x_ref[2]
        zero = jnp.zeros_like(x0)

        rows = []
        for c in range(n_classes):            # static unroll (C is tiny)
            v0r = v0i = v1r = v1i = None
            for l in range(n_layers):          # static unroll over layers
                base = (l * n_classes + c) * n_feat
                th_a = x0 * w_ref[base + 0] + th_ref[base + 0]
                phi = x1 * w_ref[base + 1] + th_ref[base + 1]
                lam = x2 * w_ref[base + 2] + th_ref[base + 2]

                ct = jnp.cos(0.5 * th_a)
                st = jnp.sin(0.5 * th_a)
                cp = jnp.cos(phi)
                sp = jnp.sin(phi)
                cl = jnp.cos(lam)
                sl = jnp.sin(lam)
                # cos/sin(phi + lam) via angle addition (saves 2 EUP calls)
                cpl = cp * cl - sp * sl
                spl = sp * cl + cp * sl

                # U3 entries as (re, im) planes; u00 is purely real (= ct).
                u01r, u01i = -cl * st, -sl * st
                u10r, u10i = cp * st, sp * st
                u11r, u11i = cpl * ct, spl * ct

                if l == 0:
                    # v = U @ [1, 0]^T  (skips the |0> init and first matvec)
                    v0r, v0i = ct, zero
                    v1r, v1i = u10r, u10i
                else:
                    # v' = U @ v  (2x2 complex matvec on separate re/im planes)
                    nv0r = ct * v0r + (u01r * v1r - u01i * v1i)
                    nv0i = ct * v0i + (u01r * v1i + u01i * v1r)
                    nv1r = (u10r * v0r - u10i * v0i) + (u11r * v1r - u11i * v1i)
                    nv1i = (u10r * v0i + u10i * v0r) + (u11r * v1i + u11i * v1r)
                    v0r, v0i, v1r, v1i = nv0r, nv0i, nv1r, nv1i

            # rho = v v^dagger (pure state): rho[i,j] = v_i * conj(v_j)
            r00r = v0r * v0r + v0i * v0i
            r11r = v1r * v1r + v1i * v1i
            r01r = v0r * v1r + v0i * v1i
            r01i = v0i * v1r - v0r * v1i

            rows.extend([r00r, r01r, r01r, r11r, zero, r01i, -r01i, zero])

        # One dense (C*8, TILE_B) store covering every class.
        out_ref[...] = jnp.concatenate(rows, axis=0)

    return kernel


@jax.jit
def classifier_multiqubit_forward(x, w, theta):
    """x: (B, D) f32; w, theta: (L, C, D) f32.  Returns rho (B, C, 2, 2) c64."""
    b, d = x.shape
    n_layers, n_classes, d2 = w.shape
    assert d == 3 and d2 == 3

    # Batch on lanes, padded to a multiple of 128 for lane-dense vld/vst.
    tile_b = 512 if b > 512 else _round_up(max(b, 1), 128)
    b_pad = _round_up(b, tile_b)

    x_p = jnp.pad(x.astype(jnp.float32), ((0, b_pad - b), (0, 0)))
    x_k = jnp.transpose(x_p, (1, 0)).reshape(d, 1, b_pad)     # (D, 1, B_pad)
    w_flat = w.astype(jnp.float32).reshape(-1)                # (L*C*D,)
    th_flat = theta.astype(jnp.float32).reshape(-1)           # (L*C*D,)

    kernel = _make_kernel(n_layers, n_classes, d)
    grid = (b_pad // tile_b,)

    out = pl.pallas_call(
        kernel,
        out_shape=jax.ShapeDtypeStruct((n_classes * 8, b_pad), jnp.float32),
        grid=grid,
        in_specs=[
            pl.BlockSpec((d, 1, tile_b), lambda i: (0, 0, i)),
            pl.BlockSpec(memory_space=pltpu.MemorySpace.SMEM),
            pl.BlockSpec(memory_space=pltpu.MemorySpace.SMEM),
        ],
        out_specs=pl.BlockSpec((n_classes * 8, tile_b), lambda i: (0, i)),
        compiler_params=pltpu.CompilerParams(
            dimension_semantics=("parallel",)),
    )(x_k, w_flat, th_flat)

    # (C*8, B) -> (C, re/im, 2, 2, B) -> complex (C, 2, 2, B) -> (B, C, 2, 2)
    out = out[:, :b].reshape(n_classes, 2, 2, 2, b)
    rho = (out[:, 0] + 1j * out[:, 1]).astype(jnp.complex64)
    return jnp.transpose(rho, (3, 0, 1, 2))


def reference_forward(x, w, theta):
    """Pure-JAX reference replicating the same semantics (for validation)."""
    b = x.shape[0]
    n_layers, n_classes, _ = w.shape
    rho = jnp.zeros((b, n_classes, 2, 2), jnp.complex64).at[:, :, 0, 0].set(1.0)
    for l in range(n_layers):
        ang = jnp.einsum('cd,bd->bcd', w[l], x) + theta[l][None]  # (B, C, D)
        t, phi, lam = ang[..., 0], ang[..., 1], ang[..., 2]
        ct = jnp.cos(t / 2).astype(jnp.complex64)
        st = jnp.sin(t / 2).astype(jnp.complex64)
        u00 = ct
        u01 = -jnp.exp(1j * lam) * st
        u10 = jnp.exp(1j * phi) * st
        u11 = jnp.exp(1j * (phi + lam)) * ct
        u = jnp.stack([jnp.stack([u00, u01], -1), jnp.stack([u10, u11], -1)], -2)
        rho = u @ rho @ jnp.conj(jnp.swapaxes(u, -1, -2))
    return rho


if __name__ == "__main__":
    key = jax.random.PRNGKey(0)
    kx, kw, kt = jax.random.split(key, 3)

    # Deterministic synthetic parameters (shapes implied by QLayerMultiQubit(D, C)):
    #   per layer: weights w (C, D), angle offsets theta (C, D)
    x = jax.random.normal(kx, (B, D), dtype=jnp.float32)
    w = jax.random.normal(kw, (L, C, D), dtype=jnp.float32) * 0.5
    theta = jax.random.normal(kt, (L, C, D), dtype=jnp.float32) * 0.5
    alpha = jnp.ones((C,), jnp.float32)  # module parameter; unused by forward()

    rho = jax.block_until_ready(classifier_multiqubit_forward(x, w, theta))
    rho_ref = jax.block_until_ready(reference_forward(x, w, theta))

    assert rho.shape == (B, C, 2, 2) and rho.dtype == jnp.complex64
    np.testing.assert_allclose(np.asarray(rho), np.asarray(rho_ref), atol=2e-5)

    # Density-matrix sanity: trace == 1 (diagonal is real & non-negative by
    # construction of |v|^2).
    tr = np.asarray(rho[..., 0, 0] + rho[..., 1, 1])
    np.testing.assert_allclose(tr, np.ones_like(tr), atol=2e-5)

    print("KERNEL_OK")
</pallas_src>

<mosaic_0001>
module attributes {stable_mosaic.version = 11 : i64} {
  func.func @kernel(%arg0: i32, %arg1: memref<3x1x128xf32, #tpu.memory_space<vmem>>, %arg2: memref<12xf32, #tpu.memory_space<smem>>, %arg3: memref<12xf32, #tpu.memory_space<smem>>, %arg4: memref<16x128xf32, #tpu.memory_space<vmem>>) attributes {dimension_semantics = [#tpu.dimension_semantics<parallel>], iteration_bounds = array<i64: 1>, scalar_prefetch = 0 : i64, scratch_operands = 0 : i64, tpu.core_type = #tpu.core_type<tc>, window_params = [{transform_indices = @transform_0, window_bounds = array<i64: 3, 1, 128>}, {transform_indices = @transform_1, window_bounds = array<i64: 12>}, {transform_indices = @transform_2, window_bounds = array<i64: 12>}, {transform_indices = @transform_3, window_bounds = array<i64: 16, 128>}]} {
    %c0 = arith.constant 0 : index
    %c0_0 = arith.constant 0 : index
    %c0_1 = arith.constant 0 : index
    %0 = vector.load %arg1[%c0, %c0_0, %c0_1] : memref<3x1x128xf32, #tpu.memory_space<vmem>>, vector<1x1x128xf32>
    %1 = vector.shape_cast %0 : vector<1x1x128xf32> to vector<1x128xf32>
    %c1 = arith.constant 1 : index
    %c0_2 = arith.constant 0 : index
    %c0_3 = arith.constant 0 : index
    %2 = vector.load %arg1[%c1, %c0_2, %c0_3] : memref<3x1x128xf32, #tpu.memory_space<vmem>>, vector<1x1x128xf32>
    %3 = vector.shape_cast %2 : vector<1x1x128xf32> to vector<1x128xf32>
    %c2 = arith.constant 2 : index
    %c0_4 = arith.constant 0 : index
    %c0_5 = arith.constant 0 : index
    %4 = vector.load %arg1[%c2, %c0_4, %c0_5] : memref<3x1x128xf32, #tpu.memory_space<vmem>>, vector<1x1x128xf32>
    %5 = vector.shape_cast %4 : vector<1x1x128xf32> to vector<1x128xf32>
    %cst = arith.constant 0.000000e+00 : f32
    %6 = vector.broadcast %cst : f32 to vector<1x128xf32>
    %c0_6 = arith.constant 0 : index
    %7 = memref.load %arg2[%c0_6] : memref<12xf32, #tpu.memory_space<smem>>
    %8 = vector.broadcast %7 : f32 to vector<1x128xf32>
    %9 = arith.mulf %1, %8 : vector<1x128xf32>
    %c0_7 = arith.constant 0 : index
    %10 = memref.load %arg3[%c0_7] : memref<12xf32, #tpu.memory_space<smem>>
    %11 = vector.broadcast %10 : f32 to vector<1x128xf32>
    %12 = arith.addf %9, %11 : vector<1x128xf32>
    %c1_8 = arith.constant 1 : index
    %13 = memref.load %arg2[%c1_8] : memref<12xf32, #tpu.memory_space<smem>>
    %14 = vector.broadcast %13 : f32 to vector<1x128xf32>
    %15 = arith.mulf %3, %14 : vector<1x128xf32>
    %c1_9 = arith.constant 1 : index
    %16 = memref.load %arg3[%c1_9] : memref<12xf32, #tpu.memory_space<smem>>
    %17 = vector.broadcast %16 : f32 to vector<1x128xf32>
    %18 = arith.addf %15, %17 : vector<1x128xf32>
    %cst_10 = arith.constant 5.000000e-01 : f32
    %19 = vector.broadcast %cst_10 : f32 to vector<1x128xf32>
    %20 = arith.mulf %19, %12 : vector<1x128xf32>
    %21 = math.cos %20 : vector<1x128xf32>
    %cst_11 = arith.constant 5.000000e-01 : f32
    %22 = vector.broadcast %cst_11 : f32 to vector<1x128xf32>
    %23 = arith.mulf %22, %12 : vector<1x128xf32>
    %24 = math.sin %23 : vector<1x128xf32>
    %25 = math.cos %18 : vector<1x128xf32>
    %26 = math.sin %18 : vector<1x128xf32>
    %27 = arith.mulf %25, %24 : vector<1x128xf32>
    %28 = arith.mulf %26, %24 : vector<1x128xf32>
    %c6 = arith.constant 6 : index
    %29 = memref.load %arg2[%c6] : memref<12xf32, #tpu.memory_space<smem>>
    %30 = vector.broadcast %29 : f32 to vector<1x128xf32>
    %31 = arith.mulf %1, %30 : vector<1x128xf32>
    %c6_12 = arith.constant 6 : index
    %32 = memref.load %arg3[%c6_12] : memref<12xf32, #tpu.memory_space<smem>>
    %33 = vector.broadcast %32 : f32 to vector<1x128xf32>
    %34 = arith.addf %31, %33 : vector<1x128xf32>
    %c7 = arith.constant 7 : index
    %35 = memref.load %arg2[%c7] : memref<12xf32, #tpu.memory_space<smem>>
    %36 = vector.broadcast %35 : f32 to vector<1x128xf32>
    %37 = arith.mulf %3, %36 : vector<1x128xf32>
    %c7_13 = arith.constant 7 : index
    %38 = memref.load %arg3[%c7_13] : memref<12xf32, #tpu.memory_space<smem>>
    %39 = vector.broadcast %38 : f32 to vector<1x128xf32>
    %40 = arith.addf %37, %39 : vector<1x128xf32>
    %c8 = arith.constant 8 : index
    %41 = memref.load %arg2[%c8] : memref<12xf32, #tpu.memory_space<smem>>
    %42 = vector.broadcast %41 : f32 to vector<1x128xf32>
    %43 = arith.mulf %5, %42 : vector<1x128xf32>
    %c8_14 = arith.constant 8 : index
    %44 = memref.load %arg3[%c8_14] : memref<12xf32, #tpu.memory_space<smem>>
    %45 = vector.broadcast %44 : f32 to vector<1x128xf32>
    %46 = arith.addf %43, %45 : vector<1x128xf32>
    %cst_15 = arith.constant 5.000000e-01 : f32
    %47 = vector.broadcast %cst_15 : f32 to vector<1x128xf32>
    %48 = arith.mulf %47, %34 : vector<1x128xf32>
    %49 = math.cos %48 : vector<1x128xf32>
    %cst_16 = arith.constant 5.000000e-01 : f32
    %50 = vector.broadcast %cst_16 : f32 to vector<1x128xf32>
    %51 = arith.mulf %50, %34 : vector<1x128xf32>
    %52 = math.sin %51 : vector<1x128xf32>
    %53 = math.cos %40 : vector<1x128xf32>
    %54 = math.sin %40 : vector<1x128xf32>
    %55 = math.cos %46 : vector<1x128xf32>
    %56 = math.sin %46 : vector<1x128xf32>
    %57 = arith.mulf %53, %55 : vector<1x128xf32>
    %58 = arith.mulf %54, %56 : vector<1x128xf32>
    %59 = arith.subf %57, %58 : vector<1x128xf32>
    %60 = arith.mulf %54, %55 : vector<1x128xf32>
    %61 = arith.mulf %53, %56 : vector<1x128xf32>
    %62 = arith.addf %60, %61 : vector<1x128xf32>
    %cst_17 = arith.constant 0.000000e+00 : f32
    %63 = vector.broadcast %cst_17 : f32 to vector<1x128xf32>
    %64 = arith.subf %63, %55 : vector<1x128xf32>
    %65 = arith.mulf %64, %52 : vector<1x128xf32>
    %cst_18 = arith.constant 0.000000e+00 : f32
    %66 = vector.broadcast %cst_18 : f32 to vector<1x128xf32>
    %67 = arith.subf %66, %56 : vector<1x128xf32>
    %68 = arith.mulf %67, %52 : vector<1x128xf32>
    %69 = arith.mulf %53, %52 : vector<1x128xf32>
    %70 = arith.mulf %54, %52 : vector<1x128xf32>
    %71 = arith.mulf %59, %49 : vector<1x128xf32>
    %72 = arith.mulf %62, %49 : vector<1x128xf32>
    %73 = arith.mulf %49, %21 : vector<1x128xf32>
    %74 = arith.mulf %65, %27 : vector<1x128xf32>
    %75 = arith.mulf %68, %28 : vector<1x128xf32>
    %76 = arith.subf %74, %75 : vector<1x128xf32>
    %77 = arith.addf %73, %76 : vector<1x128xf32>
    %78 = arith.mulf %49, %6 : vector<1x128xf32>
    %79 = arith.mulf %65, %28 : vector<1x128xf32>
    %80 = arith.mulf %68, %27 : vector<1x128xf32>
    %81 = arith.addf %79, %80 : vector<1x128xf32>
    %82 = arith.addf %78, %81 : vector<1x128xf32>
    %83 = arith.mulf %69, %21 : vector<1x128xf32>
    %84 = arith.mulf %70, %6 : vector<1x128xf32>
    %85 = arith.subf %83, %84 : vector<1x128xf32>
    %86 = arith.mulf %71, %27 : vector<1x128xf32>
    %87 = arith.mulf %72, %28 : vector<1x128xf32>
    %88 = arith.subf %86, %87 : vector<1x128xf32>
    %89 = arith.addf %85, %88 : vector<1x128xf32>
    %90 = arith.mulf %69, %6 : vector<1x128xf32>
    %91 = arith.mulf %70, %21 : vector<1x128xf32>
    %92 = arith.addf %90, %91 : vector<1x128xf32>
    %93 = arith.mulf %71, %28 : vector<1x128xf32>
    %94 = arith.mulf %72, %27 : vector<1x128xf32>
    %95 = arith.addf %93, %94 : vector<1x128xf32>
    %96 = arith.addf %92, %95 : vector<1x128xf32>
    %97 = arith.mulf %77, %77 : vector<1x128xf32>
    %98 = arith.mulf %82, %82 : vector<1x128xf32>
    %99 = arith.addf %97, %98 : vector<1x128xf32>
    %100 = arith.mulf %89, %89 : vector<1x128xf32>
    %101 = arith.mulf %96, %96 : vector<1x128xf32>
    %102 = arith.addf %100, %101 : vector<1x128xf32>
    %103 = arith.mulf %77, %89 : vector<1x128xf32>
    %104 = arith.mulf %82, %96 : vector<1x128xf32>
    %105 = arith.addf %103, %104 : vector<1x128xf32>
    %106 = arith.mulf %82, %89 : vector<1x128xf32>
    %107 = arith.mulf %77, %96 : vector<1x128xf32>
    %108 = arith.subf %106, %107 : vector<1x128xf32>
    %cst_19 = arith.constant 0.000000e+00 : f32
    %109 = vector.broadcast %cst_19 : f32 to vector<1x128xf32>
    %110 = arith.subf %109, %108 : vector<1x128xf32>
    %c3 = arith.constant 3 : index
    %111 = memref.load %arg2[%c3] : memref<12xf32, #tpu.memory_space<smem>>
    %112 = vector.broadcast %111 : f32 to vector<1x128xf32>
    %113 = arith.mulf %1, %112 : vector<1x128xf32>
    %c3_20 = arith.constant 3 : index
    %114 = memref.load %arg3[%c3_20] : memref<12xf32, #tpu.memory_space<smem>>
    %115 = vector.broadcast %114 : f32 to vector<1x128xf32>
    %116 = arith.addf %113, %115 : vector<1x128xf32>
    %c4 = arith.constant 4 : index
    %117 = memref.load %arg2[%c4] : memref<12xf32, #tpu.memory_space<smem>>
    %118 = vector.broadcast %117 : f32 to vector<1x128xf32>
    %119 = arith.mulf %3, %118 : vector<1x128xf32>
    %c4_21 = arith.constant 4 : index
    %120 = memref.load %arg3[%c4_21] : memref<12xf32, #tpu.memory_space<smem>>
    %121 = vector.broadcast %120 : f32 to vector<1x128xf32>
    %122 = arith.addf %119, %121 : vector<1x128xf32>
    %cst_22 = arith.constant 5.000000e-01 : f32
    %123 = vector.broadcast %cst_22 : f32 to vector<1x128xf32>
    %124 = arith.mulf %123, %116 : vector<1x128xf32>
    %125 = math.cos %124 : vector<1x128xf32>
    %cst_23 = arith.constant 5.000000e-01 : f32
    %126 = vector.broadcast %cst_23 : f32 to vector<1x128xf32>
    %127 = arith.mulf %126, %116 : vector<1x128xf32>
    %128 = math.sin %127 : vector<1x128xf32>
    %129 = math.cos %122 : vector<1x128xf32>
    %130 = math.sin %122 : vector<1x128xf32>
    %131 = arith.mulf %129, %128 : vector<1x128xf32>
    %132 = arith.mulf %130, %128 : vector<1x128xf32>
    %c9 = arith.constant 9 : index
    %133 = memref.load %arg2[%c9] : memref<12xf32, #tpu.memory_space<smem>>
    %134 = vector.broadcast %133 : f32 to vector<1x128xf32>
    %135 = arith.mulf %1, %134 : vector<1x128xf32>
    %c9_24 = arith.constant 9 : index
    %136 = memref.load %arg3[%c9_24] : memref<12xf32, #tpu.memory_space<smem>>
    %137 = vector.broadcast %136 : f32 to vector<1x128xf32>
    %138 = arith.addf %135, %137 : vector<1x128xf32>
    %c10 = arith.constant 10 : index
    %139 = memref.load %arg2[%c10] : memref<12xf32, #tpu.memory_space<smem>>
    %140 = vector.broadcast %139 : f32 to vector<1x128xf32>
    %141 = arith.mulf %3, %140 : vector<1x128xf32>
    %c10_25 = arith.constant 10 : index
    %142 = memref.load %arg3[%c10_25] : memref<12xf32, #tpu.memory_space<smem>>
    %143 = vector.broadcast %142 : f32 to vector<1x128xf32>
    %144 = arith.addf %141, %143 : vector<1x128xf32>
    %c11 = arith.constant 11 : index
    %145 = memref.load %arg2[%c11] : memref<12xf32, #tpu.memory_space<smem>>
    %146 = vector.broadcast %145 : f32 to vector<1x128xf32>
    %147 = arith.mulf %5, %146 : vector<1x128xf32>
    %c11_26 = arith.constant 11 : index
    %148 = memref.load %arg3[%c11_26] : memref<12xf32, #tpu.memory_space<smem>>
    %149 = vector.broadcast %148 : f32 to vector<1x128xf32>
    %150 = arith.addf %147, %149 : vector<1x128xf32>
    %cst_27 = arith.constant 5.000000e-01 : f32
    %151 = vector.broadcast %cst_27 : f32 to vector<1x128xf32>
    %152 = arith.mulf %151, %138 : vector<1x128xf32>
    %153 = math.cos %152 : vector<1x128xf32>
    %cst_28 = arith.constant 5.000000e-01 : f32
    %154 = vector.broadcast %cst_28 : f32 to vector<1x128xf32>
    %155 = arith.mulf %154, %138 : vector<1x128xf32>
    %156 = math.sin %155 : vector<1x128xf32>
    %157 = math.cos %144 : vector<1x128xf32>
    %158 = math.sin %144 : vector<1x128xf32>
    %159 = math.cos %150 : vector<1x128xf32>
    %160 = math.sin %150 : vector<1x128xf32>
    %161 = arith.mulf %157, %159 : vector<1x128xf32>
    %162 = arith.mulf %158, %160 : vector<1x128xf32>
    %163 = arith.subf %161, %162 : vector<1x128xf32>
    %164 = arith.mulf %158, %159 : vector<1x128xf32>
    %165 = arith.mulf %157, %160 : vector<1x128xf32>
    %166 = arith.addf %164, %165 : vector<1x128xf32>
    %cst_29 = arith.constant 0.000000e+00 : f32
    %167 = vector.broadcast %cst_29 : f32 to vector<1x128xf32>
    %168 = arith.subf %167, %159 : vector<1x128xf32>
    %169 = arith.mulf %168, %156 : vector<1x128xf32>
    %cst_30 = arith.constant 0.000000e+00 : f32
    %170 = vector.broadcast %cst_30 : f32 to vector<1x128xf32>
    %171 = arith.subf %170, %160 : vector<1x128xf32>
    %172 = arith.mulf %171, %156 : vector<1x128xf32>
    %173 = arith.mulf %157, %156 : vector<1x128xf32>
    %174 = arith.mulf %158, %156 : vector<1x128xf32>
    %175 = arith.mulf %163, %153 : vector<1x128xf32>
    %176 = arith.mulf %166, %153 : vector<1x128xf32>
    %177 = arith.mulf %153, %125 : vector<1x128xf32>
    %178 = arith.mulf %169, %131 : vector<1x128xf32>
    %179 = arith.mulf %172, %132 : vector<1x128xf32>
    %180 = arith.subf %178, %179 : vector<1x128xf32>
    %181 = arith.addf %177, %180 : vector<1x128xf32>
    %182 = arith.mulf %153, %6 : vector<1x128xf32>
    %183 = arith.mulf %169, %132 : vector<1x128xf32>
    %184 = arith.mulf %172, %131 : vector<1x128xf32>
    %185 = arith.addf %183, %184 : vector<1x128xf32>
    %186 = arith.addf %182, %185 : vector<1x128xf32>
    %187 = arith.mulf %173, %125 : vector<1x128xf32>
    %188 = arith.mulf %174, %6 : vector<1x128xf32>
    %189 = arith.subf %187, %188 : vector<1x128xf32>
    %190 = arith.mulf %175, %131 : vector<1x128xf32>
    %191 = arith.mulf %176, %132 : vector<1x128xf32>
    %192 = arith.subf %190, %191 : vector<1x128xf32>
    %193 = arith.addf %189, %192 : vector<1x128xf32>
    %194 = arith.mulf %173, %6 : vector<1x128xf32>
    %195 = arith.mulf %174, %125 : vector<1x128xf32>
    %196 = arith.addf %194, %195 : vector<1x128xf32>
    %197 = arith.mulf %175, %132 : vector<1x128xf32>
    %198 = arith.mulf %176, %131 : vector<1x128xf32>
    %199 = arith.addf %197, %198 : vector<1x128xf32>
    %200 = arith.addf %196, %199 : vector<1x128xf32>
    %201 = arith.mulf %181, %181 : vector<1x128xf32>
    %202 = arith.mulf %186, %186 : vector<1x128xf32>
    %203 = arith.addf %201, %202 : vector<1x128xf32>
    %204 = arith.mulf %193, %193 : vector<1x128xf32>
    %205 = arith.mulf %200, %200 : vector<1x128xf32>
    %206 = arith.addf %204, %205 : vector<1x128xf32>
    %207 = arith.mulf %181, %193 : vector<1x128xf32>
    %208 = arith.mulf %186, %200 : vector<1x128xf32>
    %209 = arith.addf %207, %208 : vector<1x128xf32>
    %210 = arith.mulf %186, %193 : vector<1x128xf32>
    %211 = arith.mulf %181, %200 : vector<1x128xf32>
    %212 = arith.subf %210, %211 : vector<1x128xf32>
    %cst_31 = arith.constant 0.000000e+00 : f32
    %213 = vector.broadcast %cst_31 : f32 to vector<1x128xf32>
    %214 = arith.subf %213, %212 : vector<1x128xf32>
    %215 = tpu.concatenate %99, %105, %105, %102, %6, %108, %110, %6, %203, %209, %209, %206, %6, %212, %214, %6 in 0 : vector<1x128xf32>, vector<1x128xf32>, vector<1x128xf32>, vector<1x128xf32>, vector<1x128xf32>, vector<1x128xf32>, vector<1x128xf32>, vector<1x128xf32>, vector<1x128xf32>, vector<1x128xf32>, vector<1x128xf32>, vector<1x128xf32>, vector<1x128xf32>, vector<1x128xf32>, vector<1x128xf32>, vector<1x128xf32> -> vector<16x128xf32>
    %c0_32 = arith.constant 0 : index
    %c0_33 = arith.constant 0 : index
    %216 = vector.load %arg4[%c0_32, %c0_33] : memref<16x128xf32, #tpu.memory_space<vmem>>, vector<16x128xf32>
    tpu.vector_store %arg4[%c0_32, %c0_33], %215 {strides = array<i32>} : memref<16x128xf32, #tpu.memory_space<vmem>>, vector<16x128xf32>,
    return
  }
  func.func @transform_0(%arg0: i32) -> (i32, i32, i32) {
    %c0_i32 = arith.constant 0 : i32
    %c0_i32_0 = arith.constant 0 : i32
    %c0_i32_1 = arith.constant 0 : i32
    return %c0_i32, %c0_i32_0, %arg0 : i32, i32, i32
  }
  func.func @transform_1(%arg0: i32) -> i32 {
    %c0_i32 = arith.constant 0 : i32
    %c0_i32_0 = arith.constant 0 : i32
    return %c0_i32 : i32
  }
  func.func @transform_2(%arg0: i32) -> i32 {
    %c0_i32 = arith.constant 0 : i32
    %c0_i32_0 = arith.constant 0 : i32
    return %c0_i32 : i32
  }
  func.func @transform_3(%arg0: i32) -> (i32, i32) {
    %c0_i32 = arith.constant 0 : i32
    %c0_i32_0 = arith.constant 0 : i32
    return %c0_i32, %arg0 : i32, i32
  }
}

</mosaic_0001>

<llo_original>
// kernel: custom-call
$region0: #{custom-call}
  %s0 = inlined_call_operand.vmem [shape: f32[8,2,2,2], index: 0, kind: input, shape index: {}]
  %s1 = inlined_call_operand.vmem [shape: f32[8,2,2,2], index: 1, kind: input, shape index: {}]
  %s2 = inlined_call_operand.hbm [shape: c64[8,2,2,2], index: 2, kind: output, shape index: {}]
  %s3 = scalar_lea.hbm %s2, 128
  $region1: #{custom-call} parent=0
    #allocation0 [shape = 's32[1]{0}', space=sflag, size = 0x4, scoped, tag = 'scoped memory for custom-call']
    %4 = vsyncpa [#allocation0], 0
    %s5 = sshll.u32 %s0, 4
    %s6 = int_to_ptr.vmem [resolvable:$true] %s5
    %8 = dma.vmem_to_hbm [thread:$0]  %s6, 128, %s2, [#allocation0]
    %9 = dma.done [#allocation0], 128
    %10 = vsyncpa [#allocation0], 1
  $region2: #{custom-call} parent=0
    #allocation1 [shape = 's32[1]{0}', space=sflag, size = 0x4, scoped, tag = 'scoped memory for custom-call']
    %11 = vsyncpa [#allocation1], 0
    %s12 = sshll.u32 %s1, 4
    %s13 = int_to_ptr.vmem [resolvable:$true] %s12
    %15 = dma.vmem_to_hbm [thread:$0]  %s13, 128, %s3, [#allocation1]
    %16 = dma.done [#allocation1], 128
    %17 = vsyncpa [#allocation1], 1

// kernel: classifier_multiqubit_forward.1
$region0: #{classifier_multiqubit_forward.1}
  #allocation0 [shape = 'u32[]', space=smem, size = 0x4, offset = 0x4, fixed_abs, tag = 'smem constant byte address 0x4 - core index']
  #allocation1 [shape = 'u32[144,128]{1,0:T(1,128)}', space=vmem, size = 0x12000, scoped, tag = 'internal scratch']
  %s0 = inlined_call_operand.vmem [shape: f32[3,1,128], index: 0, kind: input, shape index: {}]
  %s1 = inlined_call_operand.vmem [shape: f32[12], index: 1, kind: input, shape index: {}]
  %s2 = inlined_call_operand.vmem [shape: f32[12], index: 2, kind: input, shape index: {}]
  %s3 = inlined_call_operand.vmem [shape: f32[16,128], index: 3, kind: output, shape index: {}]
  %s4 = sld [smem:[#allocation0]]
  $region30: #{classifier_multiqubit_forward.1} parent=0
    _
  %s6 = ssub.s32 1, %s4
  %s7 = scalar_select 0, %s6, %s4
  $region1: #{classifier_multiqubit_forward.1} parent=0
    #allocation2 [shape = 'u8[512]{0}', space=smem, size = 0x200, scoped, tag = 'input window, operand 1, single buffered']
    #allocation3 [shape = 's32[1]{0}', space=sflag, size = 0x4, scoped, tag = 'scoped memory for classifier_multiqubit_forward.1']
    #allocation4 [shape = 'u8[512]{0}', space=smem, size = 0x200, scoped, tag = 'input window, operand 2, single buffered']
    #allocation5 [shape = 's32[1]{0}', space=sflag, size = 0x4, scoped, tag = 'scoped memory for classifier_multiqubit_forward.1']
    %8 = vsyncpa [#allocation3], 0
    %9 = vsyncpa [#allocation5], 0
    // Predicated region
    $region2: #{classifier_multiqubit_forward.1} parent=1 // pred_check
      _
    $region3: #{classifier_multiqubit_forward.1} parent=1 // pred_check_branch
      %11 = sbr.rel (0) target = $region5
    $region4: #{classifier_multiqubit_forward.1} parent=1 // pred_region
      _
    $region5: #{classifier_multiqubit_forward.1} parent=1 // pred_fallthru
      _
    // Predicated region
    $region6: #{classifier_multiqubit_forward.1} parent=1 // pred_check
      _
    $region7: #{classifier_multiqubit_forward.1} parent=1 // pred_check_branch
      %13 = sbr.rel (0) target = $region9
    $region8: #{classifier_multiqubit_forward.1} parent=1 // pred_region
      %s15 = ssub.s32 16, 16
      %16 = vsyncadd [#allocation3], %s15
      %s18 = sshll.u32 %s1, 4
      %s19 = int_to_ptr.vmem [resolvable:$true] %s18
      %21 = dma.vmem_to_smem %s19, 16, [#allocation2], [#allocation3]
    $region9: #{classifier_multiqubit_forward.1} parent=1 // pred_fallthru
      _
    // Predicated region
    $region10: #{classifier_multiqubit_forward.1} parent=1 // pred_check
      _
    $region11: #{classifier_multiqubit_forward.1} parent=1 // pred_check_branch
      %23 = sbr.rel (0) target = $region13
    $region12: #{classifier_multiqubit_forward.1} parent=1 // pred_region
      %s25 = ssub.s32 16, 16
      %26 = vsyncadd [#allocation5], %s25
      %s28 = sshll.u32 %s2, 4
      %s29 = int_to_ptr.vmem [resolvable:$true] %s28
      %31 = dma.vmem_to_smem %s29, 16, [#allocation4], [#allocation5]
    $region13: #{classifier_multiqubit_forward.1} parent=1 // pred_fallthru
      _
    // Predicated region
    $region14: #{classifier_multiqubit_forward.1} parent=1 // pred_check
      _
    $region15: #{classifier_multiqubit_forward.1} parent=1 // pred_check_branch
      %33 = sbr.rel (0) target = $region17
    $region16: #{classifier_multiqubit_forward.1} parent=1 // pred_region
      %34 = dma.done [#allocation3], 16
    $region17: #{classifier_multiqubit_forward.1} parent=1 // pred_fallthru
      _
    // Predicated region
    $region18: #{classifier_multiqubit_forward.1} parent=1 // pred_check
      _
    $region19: #{classifier_multiqubit_forward.1} parent=1 // pred_check_branch
      %36 = sbr.rel (0) target = $region21
    $region20: #{classifier_multiqubit_forward.1} parent=1 // pred_region
      %37 = dma.done [#allocation5], 16
    $region21: #{classifier_multiqubit_forward.1} parent=1 // pred_fallthru
      _
    %38 = sfence
    %v39 = vld [vmem:[%s0] sm:$0x1]
    %s40 = scalar_lea.vmem %s0, 1
    %v41 = vld [vmem:[%s40] sm:$0x1]
    %s42 = scalar_lea.vmem %s0, 2
    %v43 = vld [vmem:[%s42] sm:$0x1]
    %s44 = sld [smem:[#allocation2]]
    %v45 = vstv %s44
    %v46 = vmul.f32 %v39, %v45
    %s47 = sld [smem:[#allocation4]]
    %v48 = vstv %s47
    %v49 = vadd.f32 %v46, %v48
    %s50 = sld [smem:[#allocation2 + $0x1]]
    %v51 = vstv %s50
    %v52 = vmul.f32 %v41, %v51
    %s53 = sld [smem:[#allocation4 + $0x1]]
    %v54 = vstv %s53
    %v55 = vadd.f32 %v52, %v54
    %v56 = vmul.f32 %v49, 0.5
    %v57 = vand.u32 2147483647, %v56
    %vm58 = vcmp.le.f32.partialorder %v57, 0.7853982
    %vm59 = vcmp.lt.s32.totalorder %v56, 0
    %v60 = vand.u32 %v56, 2139095040
    %v61 = vshrl.u32 %v60, 23
    %v62 = vsub.s32 %v61, 127
    %v63 = vand.u32 2147483647, %v56
    %v64 = vand.u32 %v63, 8388607
    %v65 = vor.u32 %v64, 8388608
    %v66 = vsub.s32 0, %v65
    %v67 = vadd.s32 %v62, 1
    %vm68 = vcmp.gt.s32.totalorder %v67, 0
    %v69 = vsel %vm68, %v67, 0
    %v70 = vshrl.u32 %v69, 5
    %v71 = vand.u32 %v69, 31
    %v72 = vsub.s32 32, %v71
    %v73 = vshrl.u32 683565275, %v72
    %v74 = vshll.u32 683565275, %v71
    %v75 = vshrl.u32 2475754826, %v72
    %v76 = vor.u32 %v74, %v75
    %v77 = vshll.u32 2475754826, %v71
    %v78 = vshrl.u32 2131351028, %v72
    %v79 = vor.u32 %v77, %v78
    %v80 = vshll.u32 2131351028, %v71
    %v81 = vshrl.u32 2102212464, %v72
    %v82 = vor.u32 %v80, %v81
    %v83 = vshll.u32 2102212464, %v71
    %v84 = vshrl.u32 920167782, %v72
    %v85 = vor.u32 %v83, %v84
    %v86 = vshll.u32 920167782, %v71
    %v87 = vshrl.u32 1326507024, %v72
    %v88 = vor.u32 %v86, %v87
    %vm89 = vcmp.lt.s32.totalorder %v70, 1
    %vm90 = vcmp.lt.s32.totalorder %v70, 2
    %vm91 = vcmp.lt.s32.totalorder %v70, 3
    %vm92 = vcmp.lt.s32.totalorder %v70, 4
    %v93 = vsel %vm89, %v73, %v76
    %v94 = vsel %vm92, %v82, 2102212464
    %v95 = vsel %vm91, %v79, %v94
    %v96 = vsel %vm90, %v93, %v95
    %v97 = vsel %vm89, %v76, %v79
    %v98 = vsel %vm92, %v85, 920167782
    %v99 = vsel %vm91, %v82, %v98
    %v100 = vsel %vm90, %v97, %v99
    %v101 = vsel %vm89, %v79, %v82
    %v102 = vsel %vm92, %v88, 1326507024
    %v103 = vsel %vm91, %v85, %v102
    %v104 = vsel %vm90, %v101, %v103
    %v105 = vshll.u32 %v65, 8
    %v106 = vmul.u32.u64.compose %v105, %v104
    %v107 = vextract.low.u32 %v106
    %v108 = vextract.high.u32 %v106
    %v109 = vmul.u32.u64.compose %v105, %v100
    %v110 = vextract.low.u32 %v109
    %v111 = vextract.high.u32 %v109
    %v112 = vmul.u32 %v105, %v96
    %v113 = vadd.s32 %v108, %v110
    %vm114 = vc.u32 %v108, %v110
    %v115 = vadd.s32 %v111, 1
    %v116 = vsel %vm114, %v115, %v111
    %v117 = vadd.s32 %v112, %v116
    %v118 = vadd.s32 %v117, 536870912
    %v119 = vshrl.u32 %v118, 30
    %v120 = vshll.u32 %v119, 30
    %v121 = vsub.s32 %v117, %v120
    %vm122 = vcmp.lt.s32.totalorder %v121, 0
    %v123 = vsub.s32 0, %v121
    %v124 = vsel %vm122, %v123, %v121
    %v125 = vclz %v124
    %v126 = vsub.s32 %v125, 2
    %vm127 = vcmp.gt.s32.totalorder 0, %v126
    %v128 = vsel %vm127, 0, %v126
    %v129 = vsub.s32 32, %v128
    %v130 = vshll.u32 %v121, %v128
    %v131 = vshrl.u32 %v113, %v129
    %v132 = vor.u32 %v130, %v131
    %v133 = vsub.s32 4294967266, %v128
    %v134 = vadd.s32 %v133, 127
    %v135 = vshll.u32 %v134, 23
    %v136 = vor.u32 4788187, %v135
    %v137 = vand.u32 2147483647, %v136
    %v139 = vcvt.s32.f32 %v132
    %v140 = vmul.f32 %v139, %v137
    %v141 = vxor.u32 %v140, 2147483648
    %v142 = vsel %vm59, %v141, %v140
    %v143 = vsub.s32 4, %v119
    %v144 = vsel %vm59, %v143, %v119
    %v145 = vsel %vm58, %v56, %v142
    %v146 = vsel %vm58, 0, %v144
    %v147 = vcosq.f32.pop %v145
    %v148 = vsinq.f32.pop %v145
    %vm149 = vweird.f32 %v56
    %v150 = vand.u32 %v146, 3
    %vm151 = vcmp.lt.s32.totalorder %v150, 2
    %vm152 = vcmp.eq.s32.totalorder %v150, 0
    %v153 = vxor.u32 %v148, 2147483648
    %v154 = vsel %vm152, %v147, %v153
    %vm155 = vcmp.eq.s32.totalorder %v150, 2
    %v156 = vxor.u32 %v147, 2147483648
    %v157 = vsel %vm155, %v156, %v148
    %v158 = vsel %vm151, %v154, %v157
    %v159 = vsel %vm149, nan, %v158
    %v160 = vand.u32 2147483647, %v56
    %vm161 = vcmp.le.f32.partialorder %v160, 0.7853982
    %vm162 = vcmp.lt.s32.totalorder %v56, 0
    %v163 = vand.u32 %v56, 2139095040
    %v164 = vshrl.u32 %v163, 23
    %v165 = vsub.s32 %v164, 127
    %v166 = vand.u32 2147483647, %v56
    %v167 = vand.u32 %v166, 8388607
    %v168 = vor.u32 %v167, 8388608
    %v169 = vsub.s32 0, %v168
    %v170 = vadd.s32 %v165, 1
    %vm171 = vcmp.gt.s32.totalorder %v170, 0
    %v172 = vsel %vm171, %v170, 0
    %v173 = vshrl.u32 %v172, 5
    %v174 = vand.u32 %v172, 31
    %v175 = vsub.s32 32, %v174
    %v176 = vshrl.u32 683565275, %v175
    %v177 = vshll.u32 683565275, %v174
    %v178 = vshrl.u32 2475754826, %v175
    %v179 = vor.u32 %v177, %v178
    %v180 = vshll.u32 2475754826, %v174
    %v181 = vshrl.u32 2131351028, %v175
    %v182 = vor.u32 %v180, %v181
    %v183 = vshll.u32 2131351028, %v174
    %v184 = vshrl.u32 2102212464, %v175
    %v185 = vor.u32 %v183, %v184
    %v186 = vshll.u32 2102212464, %v174
    %v187 = vshrl.u32 920167782, %v175
    %v188 = vor.u32 %v186, %v187
    %v189 = vshll.u32 920167782, %v174
    %v190 = vshrl.u32 1326507024, %v175
    %v191 = vor.u32 %v189, %v190
    %vm192 = vcmp.lt.s32.totalorder %v173, 1
    %vm193 = vcmp.lt.s32.totalorder %v173, 2
    %vm194 = vcmp.lt.s32.totalorder %v173, 3
    %vm195 = vcmp.lt.s32.totalorder %v173, 4
    %v196 = vsel %vm192, %v176, %v179
    %v197 = vsel %vm195, %v185, 2102212464
    %v198 = vsel %vm194, %v182, %v197
    %v199 = vsel %vm193, %v196, %v198
    %v200 = vsel %vm192, %v179, %v182
    %v201 = vsel %vm195, %v188, 920167782
    %v202 = vsel %vm194, %v185, %v201
    %v203 = vsel %vm193, %v200, %v202
    %v204 = vsel %vm192, %v182, %v185
    %v205 = vsel %vm195, %v191, 1326507024
    %v206 = vsel %vm194, %v188, %v205
    %v207 = vsel %vm193, %v204, %v206
    %v208 = vshll.u32 %v168, 8
    %v209 = vmul.u32.u64.compose %v208, %v207
    %v210 = vextract.low.u32 %v209
    %v211 = vextract.high.u32 %v209
    %v212 = vmul.u32.u64.compose %v208, %v203
    %v213 = vextract.low.u32 %v212
    %v214 = vextract.high.u32 %v212
    %v215 = vmul.u32 %v208, %v199
    %v216 = vadd.s32 %v211, %v213
    %vm217 = vc.u32 %v211, %v213
    %v218 = vadd.s32 %v214, 1
    %v219 = vsel %vm217, %v218, %v214
    %v220 = vadd.s32 %v215, %v219
    %v221 = vadd.s32 %v220, 536870912
    %v222 = vshrl.u32 %v221, 30
    %v223 = vshll.u32 %v222, 30
    %v224 = vsub.s32 %v220, %v223
    %vm225 = vcmp.lt.s32.totalorder %v224, 0
    %v226 = vsub.s32 0, %v224
    %v227 = vsel %vm225, %v226, %v224
    %v228 = vclz %v227
    %v229 = vsub.s32 %v228, 2
    %vm230 = vcmp.gt.s32.totalorder 0, %v229
    %v231 = vsel %vm230, 0, %v229
    %v232 = vsub.s32 32, %v231
    %v233 = vshll.u32 %v224, %v231
    %v234 = vshrl.u32 %v216, %v232
    %v235 = vor.u32 %v233, %v234
    %v236 = vsub.s32 4294967266, %v231
    %v237 = vadd.s32 %v236, 127
    %v238 = vshll.u32 %v237, 23
    %v239 = vor.u32 4788187, %v238
    %v240 = vand.u32 2147483647, %v239
    %v242 = vcvt.s32.f32 %v235
    %v243 = vmul.f32 %v242, %v240
    %v244 = vxor.u32 %v243, 2147483648
    %v245 = vsel %vm162, %v244, %v243
    %v246 = vsub.s32 4, %v222
    %v247 = vsel %vm162, %v246, %v222
    %v248 = vsel %vm161, %v56, %v245
    %v249 = vsel %vm161, 0, %v247
    %v250 = vcosq.f32.pop %v248
    %v251 = vsinq.f32.pop %v248
    %vm252 = vweird.f32 %v56
    %v253 = vadd.s32 %v249, 3
    %v254 = vand.u32 %v253, 3
    %vm255 = vcmp.lt.s32.totalorder %v254, 2
    %vm256 = vcmp.eq.s32.totalorder %v254, 0
    %v257 = vxor.u32 %v251, 2147483648
    %v258 = vsel %vm256, %v250, %v257
    %vm259 = vcmp.eq.s32.totalorder %v254, 2
    %v260 = vxor.u32 %v250, 2147483648
    %v261 = vsel %vm259, %v260, %v251
    %v262 = vsel %vm255, %v258, %v261
    %v263 = vsel %vm252, nan, %v262
    %v264 = vand.u32 2147483647, %v55
    %vm265 = vcmp.le.f32.partialorder %v264, 0.7853982
    %vm266 = vcmp.lt.s32.totalorder %v55, 0
    %v267 = vand.u32 %v55, 2139095040
    %v268 = vshrl.u32 %v267, 23
    %v269 = vsub.s32 %v268, 127
    %v270 = vand.u32 2147483647, %v55
    %v271 = vand.u32 %v270, 8388607
    %v272 = vor.u32 %v271, 8388608
    %v273 = vsub.s32 0, %v272
    %v274 = vadd.s32 %v269, 1
    %vm275 = vcmp.gt.s32.totalorder %v274, 0
    %v276 = vsel %vm275, %v274, 0
    %v277 = vshrl.u32 %v276, 5
    %v278 = vand.u32 %v276, 31
    %v279 = vsub.s32 32, %v278
    %v280 = vshrl.u32 683565275, %v279
    %v281 = vshll.u32 683565275, %v278
    %v282 = vshrl.u32 2475754826, %v279
    %v283 = vor.u32 %v281, %v282
    %v284 = vshll.u32 2475754826, %v278
    %v285 = vshrl.u32 2131351028, %v279
    %v286 = vor.u32 %v284, %v285
    %v287 = vshll.u32 2131351028, %v278
    %v288 = vshrl.u32 2102212464, %v279
    %v289 = vor.u32 %v287, %v288
    %v290 = vshll.u32 2102212464, %v278
    %v291 = vshrl.u32 920167782, %v279
    %v292 = vor.u32 %v290, %v291
    %v293 = vshll.u32 920167782, %v278
    %v294 = vshrl.u32 1326507024, %v279
    %v295 = vor.u32 %v293, %v294
    %vm296 = vcmp.lt.s32.totalorder %v277, 1
    %vm297 = vcmp.lt.s32.totalorder %v277, 2
    %vm298 = vcmp.lt.s32.totalorder %v277, 3
    %vm299 = vcmp.lt.s32.totalorder %v277, 4
    %v300 = vsel %vm296, %v280, %v283
    %v301 = vsel %vm299, %v289, 2102212464
    %v302 = vsel %vm298, %v286, %v301
    %v303 = vsel %vm297, %v300, %v302
    %v304 = vsel %vm296, %v283, %v286
    %v305 = vsel %vm299, %v292, 920167782
    %v306 = vsel %vm298, %v289, %v305
    %v307 = vsel %vm297, %v304, %v306
    %v308 = vsel %vm296, %v286, %v289
    %v309 = vsel %vm299, %v295, 1326507024
    %v310 = vsel %vm298, %v292, %v309
    %v311 = vsel %vm297, %v308, %v310
    %v312 = vshll.u32 %v272, 8
    %v313 = vmul.u32.u64.compose %v312, %v311
    %v314 = vextract.low.u32 %v313
    %v315 = vextract.high.u32 %v313
    %v316 = vmul.u32.u64.compose %v312, %v307
    %v317 = vextract.low.u32 %v316
    %v318 = vextract.high.u32 %v316
    %v319 = vmul.u32 %v312, %v303
    %v320 = vadd.s32 %v315, %v317
    %vm321 = vc.u32 %v315, %v317
    %v322 = vadd.s32 %v318, 1
    %v323 = vsel %vm321, %v322, %v318
    %v324 = vadd.s32 %v319, %v323
    %v325 = vadd.s32 %v324, 536870912
    %v326 = vshrl.u32 %v325, 30
    %v327 = vshll.u32 %v326, 30
    %v328 = vsub.s32 %v324, %v327
    %vm329 = vcmp.lt.s32.totalorder %v328, 0
    %v330 = vsub.s32 0, %v328
    %v331 = vsel %vm329, %v330, %v328
    %v332 = vclz %v331
    %v333 = vsub.s32 %v332, 2
    %vm334 = vcmp.gt.s32.totalorder 0, %v333
    %v335 = vsel %vm334, 0, %v333
    %v336 = vsub.s32 32, %v335
    %v337 = vshll.u32 %v328, %v335
    %v338 = vshrl.u32 %v320, %v336
    %v339 = vor.u32 %v337, %v338
    %v340 = vsub.s32 4294967266, %v335
    %v341 = vadd.s32 %v340, 127
    %v342 = vshll.u32 %v341, 23
    %v343 = vor.u32 4788187, %v342
    %v344 = vand.u32 2147483647, %v343
    %v346 = vcvt.s32.f32 %v339
    %v347 = vmul.f32 %v346, %v344
    %v348 = vxor.u32 %v347, 2147483648
    %v349 = vsel %vm266, %v348, %v347
    %v350 = vsub.s32 4, %v326
    %v351 = vsel %vm266, %v350, %v326
    %v352 = vsel %vm265, %v55, %v349
    %v353 = vsel %vm265, 0, %v351
    %v354 = vcosq.f32.pop %v352
    %v355 = vsinq.f32.pop %v352
    %vm356 = vweird.f32 %v55
    %v357 = vand.u32 %v353, 3
    %vm358 = vcmp.lt.s32.totalorder %v357, 2
    %vm359 = vcmp.eq.s32.totalorder %v357, 0
    %v360 = vxor.u32 %v355, 2147483648
    %v361 = vsel %vm359, %v354, %v360
    %vm362 = vcmp.eq.s32.totalorder %v357, 2
    %v363 = vxor.u32 %v354, 2147483648
    %v364 = vsel %vm362, %v363, %v355
    %v365 = vsel %vm358, %v361, %v364
    %v366 = vsel %vm356, nan, %v365
    %v367 = vand.u32 2147483647, %v55
    %vm368 = vcmp.le.f32.partialorder %v367, 0.7853982
    %vm369 = vcmp.lt.s32.totalorder %v55, 0
    %v370 = vand.u32 %v55, 2139095040
    %v371 = vshrl.u32 %v370, 23
    %v372 = vsub.s32 %v371, 127
    %v373 = vand.u32 2147483647, %v55
    %v374 = vand.u32 %v373, 8388607
    %v375 = vor.u32 %v374, 8388608
    %v376 = vsub.s32 0, %v375
    %v377 = vadd.s32 %v372, 1
    %vm378 = vcmp.gt.s32.totalorder %v377, 0
    %v379 = vsel %vm378, %v377, 0
    %v380 = vshrl.u32 %v379, 5
    %v381 = vand.u32 %v379, 31
    %v382 = vsub.s32 32, %v381
    %v383 = vshrl.u32 683565275, %v382
    %v384 = vshll.u32 683565275, %v381
    %v385 = vshrl.u32 2475754826, %v382
    %v386 = vor.u32 %v384, %v385
    %v387 = vshll.u32 2475754826, %v381
    %v388 = vshrl.u32 2131351028, %v382
    %v389 = vor.u32 %v387, %v388
    %v390 = vshll.u32 2131351028, %v381
    %v391 = vshrl.u32 2102212464, %v382
    %v392 = vor.u32 %v390, %v391
    %v393 = vshll.u32 2102212464, %v381
    %v394 = vshrl.u32 920167782, %v382
    %v395 = vor.u32 %v393, %v394
    %v396 = vshll.u32 920167782, %v381
    %v397 = vshrl.u32 1326507024, %v382
    %v398 = vor.u32 %v396, %v397
    %vm399 = vcmp.lt.s32.totalorder %v380, 1
    %vm400 = vcmp.lt.s32.totalorder %v380, 2
    %vm401 = vcmp.lt.s32.totalorder %v380, 3
    %vm402 = vcmp.lt.s32.totalorder %v380, 4
    %v403 = vsel %vm399, %v383, %v386
    %v404 = vsel %vm402, %v392, 2102212464
    %v405 = vsel %vm401, %v389, %v404
    %v406 = vsel %vm400, %v403, %v405
    %v407 = vsel %vm399, %v386, %v389
    %v408 = vsel %vm402, %v395, 920167782
    %v409 = vsel %vm401, %v392, %v408
    %v410 = vsel %vm400, %v407, %v409
    %v411 = vsel %vm399, %v389, %v392
    %v412 = vsel %vm402, %v398, 1326507024
    %v413 = vsel %vm401, %v395, %v412
    %v414 = vsel %vm400, %v411, %v413
    %v415 = vshll.u32 %v375, 8
    %v416 = vmul.u32.u64.compose %v415, %v414
    %v417 = vextract.low.u32 %v416
    %v418 = vextract.high.u32 %v416
    %v419 = vmul.u32.u64.compose %v415, %v410
    %v420 = vextract.low.u32 %v419
    %v421 = vextract.high.u32 %v419
    %v422 = vmul.u32 %v415, %v406
    %v423 = vadd.s32 %v418, %v420
    %vm424 = vc.u32 %v418, %v420
    %v425 = vadd.s32 %v421, 1
    %v426 = vsel %vm424, %v425, %v421
    %v427 = vadd.s32 %v422, %v426
    %v428 = vadd.s32 %v427, 536870912
    %v429 = vshrl.u32 %v428, 30
    %v430 = vshll.u32 %v429, 30
    %v431 = vsub.s32 %v427, %v430
    %vm432 = vcmp.lt.s32.totalorder %v431, 0
    %v433 = vsub.s32 0, %v431
    %v434 = vsel %vm432, %v433, %v431
    %v435 = vclz %v434
    %v436 = vsub.s32 %v435, 2
    %vm437 = vcmp.gt.s32.totalorder 0, %v436
    %v438 = vsel %vm437, 0, %v436
    %v439 = vsub.s32 32, %v438
    %v440 = vshll.u32 %v431, %v438
    %v441 = vshrl.u32 %v423, %v439
    %v442 = vor.u32 %v440, %v441
    %v443 = vsub.s32 4294967266, %v438
    %v444 = vadd.s32 %v443, 127
    %v445 = vshll.u32 %v444, 23
    %v446 = vor.u32 4788187, %v445
    %v447 = vand.u32 2147483647, %v446
    %v449 = vcvt.s32.f32 %v442
    %v450 = vmul.f32 %v449, %v447
    %v451 = vxor.u32 %v450, 2147483648
    %v452 = vsel %vm369, %v451, %v450
    %v453 = vsub.s32 4, %v429
    %v454 = vsel %vm369, %v453, %v429
    %v455 = vsel %vm368, %v55, %v452
    %v456 = vsel %vm368, 0, %v454
    %v457 = vcosq.f32.pop %v455
    %v458 = vsinq.f32.pop %v455
    %vm459 = vweird.f32 %v55
    %v460 = vadd.s32 %v456, 3
    %v461 = vand.u32 %v460, 3
    %vm462 = vcmp.lt.s32.totalorder %v461, 2
    %vm463 = vcmp.eq.s32.totalorder %v461, 0
    %v464 = vxor.u32 %v458, 2147483648
    %v465 = vsel %vm463, %v457, %v464
    %vm466 = vcmp.eq.s32.totalorder %v461, 2
    %v467 = vxor.u32 %v457, 2147483648
    %v468 = vsel %vm466, %v467, %v458
    %v469 = vsel %vm462, %v465, %v468
    %v470 = vsel %vm459, nan, %v469
    %v471 = vmul.f32 %v366, %v263
    %v472 = vmul.f32 %v470, %v263
    %s473 = sld [smem:[#allocation2 + $0x6]]
    %v474 = vstv %s473
    %v475 = vmul.f32 %v39, %v474
    %s476 = sld [smem:[#allocation4 + $0x6]]
    %v477 = vstv %s476
    %v478 = vadd.f32 %v475, %v477
    %s479 = sld [smem:[#allocation2 + $0x7]]
    %v480 = vstv %s479
    %v481 = vmul.f32 %v41, %v480
    %s482 = sld [smem:[#allocation4 + $0x7]]
    %v483 = vstv %s482
    %v484 = vadd.f32 %v481, %v483
    %s485 = sld [smem:[#allocation2 + $0x8]]
    %v486 = vstv %s485
    %v487 = vmul.f32 %v43, %v486
    %s488 = sld [smem:[#allocation4 + $0x8]]
    %v489 = vstv %s488
    %v490 = vadd.f32 %v487, %v489
    %v491 = vmul.f32 %v478, 0.5
    %v492 = vand.u32 2147483647, %v491
    %vm493 = vcmp.le.f32.partialorder %v492, 0.7853982
    %vm494 = vcmp.lt.s32.totalorder %v491, 0
    %v495 = vand.u32 %v491, 2139095040
    %v496 = vshrl.u32 %v495, 23
    %v497 = vsub.s32 %v496, 127
    %v498 = vand.u32 2147483647, %v491
    %v499 = vand.u32 %v498, 8388607
    %v500 = vor.u32 %v499, 8388608
    %v501 = vsub.s32 0, %v500
    %v502 = vadd.s32 %v497, 1
    %vm503 = vcmp.gt.s32.totalorder %v502, 0
    %v504 = vsel %vm503, %v502, 0
    %v505 = vshrl.u32 %v504, 5
    %v506 = vand.u32 %v504, 31
    %v507 = vsub.s32 32, %v506
    %v508 = vshrl.u32 683565275, %v507
    %v509 = vshll.u32 683565275, %v506
    %v510 = vshrl.u32 2475754826, %v507
    %v511 = vor.u32 %v509, %v510
    %v512 = vshll.u32 2475754826, %v506
    %v513 = vshrl.u32 2131351028, %v507
    %v514 = vor.u32 %v512, %v513
    %v515 = vshll.u32 2131351028, %v506
    %v516 = vshrl.u32 2102212464, %v507
    %v517 = vor.u32 %v515, %v516
    %v518 = vshll.u32 2102212464, %v506
    %v519 = vshrl.u32 920167782, %v507
    %v520 = vor.u32 %v518, %v519
    %v521 = vshll.u32 920167782, %v506
    %v522 = vshrl.u32 1326507024, %v507
    %v523 = vor.u32 %v521, %v522
    %vm524 = vcmp.lt.s32.totalorder %v505, 1
    %vm525 = vcmp.lt.s32.totalorder %v505, 2
    %vm526 = vcmp.lt.s32.totalorder %v505, 3
    %vm527 = vcmp.lt.s32.totalorder %v505, 4
    %v528 = vsel %vm524, %v508, %v511
    %v529 = vsel %vm527, %v517, 2102212464
    %v530 = vsel %vm526, %v514, %v529
    %v531 = vsel %vm525, %v528, %v530
    %v532 = vsel %vm524, %v511, %v514
    %v533 = vsel %vm527, %v520, 920167782
    %v534 = vsel %vm526, %v517, %v533
    %v535 = vsel %vm525, %v532, %v534
    %v536 = vsel %vm524, %v514, %v517
    %v537 = vsel %vm527, %v523, 1326507024
    %v538 = vsel %vm526, %v520, %v537
    %v539 = vsel %vm525, %v536, %v538
    %v540 = vshll.u32 %v500, 8
    %v541 = vmul.u32.u64.compose %v540, %v539
    %v542 = vextract.low.u32 %v541
    %v543 = vextract.high.u32 %v541
    %v544 = vmul.u32.u64.compose %v540, %v535
    %v545 = vextract.low.u32 %v544
    %v546 = vextract.high.u32 %v544
    %v547 = vmul.u32 %v540, %v531
    %v548 = vadd.s32 %v543, %v545
    %vm549 = vc.u32 %v543, %v545
    %v550 = vadd.s32 %v546, 1
    %v551 = vsel %vm549, %v550, %v546
    %v552 = vadd.s32 %v547, %v551
    %v553 = vadd.s32 %v552, 536870912
    %v554 = vshrl.u32 %v553, 30
    %v555 = vshll.u32 %v554, 30
    %v556 = vsub.s32 %v552, %v555
    %vm557 = vcmp.lt.s32.totalorder %v556, 0
    %v558 = vsub.s32 0, %v556
    %v559 = vsel %vm557, %v558, %v556
    %v560 = vclz %v559
    %v561 = vsub.s32 %v560, 2
    %vm562 = vcmp.gt.s32.totalorder 0, %v561
    %v563 = vsel %vm562, 0, %v561
    %v564 = vsub.s32 32, %v563
    %v565 = vshll.u32 %v556, %v563
    %v566 = vshrl.u32 %v548, %v564
    %v567 = vor.u32 %v565, %v566
    %v568 = vsub.s32 4294967266, %v563
    %v569 = vadd.s32 %v568, 127
    %v570 = vshll.u32 %v569, 23
    %v571 = vor.u32 4788187, %v570
    %v572 = vand.u32 2147483647, %v571
    %v574 = vcvt.s32.f32 %v567
    %v575 = vmul.f32 %v574, %v572
    %v576 = vxor.u32 %v575, 2147483648
    %v577 = vsel %vm494, %v576, %v575
    %v578 = vsub.s32 4, %v554
    %v579 = vsel %vm494, %v578, %v554
    %v580 = vsel %vm493, %v491, %v577
    %v581 = vsel %vm493, 0, %v579
    %v582 = vcosq.f32.pop %v580
    %v583 = vsinq.f32.pop %v580
    %vm584 = vweird.f32 %v491
    %v585 = vand.u32 %v581, 3
    %vm586 = vcmp.lt.s32.totalorder %v585, 2
    %vm587 = vcmp.eq.s32.totalorder %v585, 0
    %v588 = vxor.u32 %v583, 2147483648
    %v589 = vsel %vm587, %v582, %v588
    %vm590 = vcmp.eq.s32.totalorder %v585, 2
    %v591 = vxor.u32 %v582, 2147483648
    %v592 = vsel %vm590, %v591, %v583
    %v593 = vsel %vm586, %v589, %v592
    %v594 = vsel %vm584, nan, %v593
    %v595 = vand.u32 2147483647, %v491
    %vm596 = vcmp.le.f32.partialorder %v595, 0.7853982
    %vm597 = vcmp.lt.s32.totalorder %v491, 0
    %v598 = vand.u32 %v491, 2139095040
    %v599 = vshrl.u32 %v598, 23
    %v600 = vsub.s32 %v599, 127
    %v601 = vand.u32 2147483647, %v491
    %v602 = vand.u32 %v601, 8388607
    %v603 = vor.u32 %v602, 8388608
    %v604 = vsub.s32 0, %v603
    %v605 = vadd.s32 %v600, 1
    %vm606 = vcmp.gt.s32.totalorder %v605, 0
    %v607 = vsel %vm606, %v605, 0
    %v608 = vshrl.u32 %v607, 5
    %v609 = vand.u32 %v607, 31
    %v610 = vsub.s32 32, %v609
    %v611 = vshrl.u32 683565275, %v610
    %v612 = vshll.u32 683565275, %v609
    %v613 = vshrl.u32 2475754826, %v610
    %v614 = vor.u32 %v612, %v613
    %v615 = vshll.u32 2475754826, %v609
    %v616 = vshrl.u32 2131351028, %v610
    %v617 = vor.u32 %v615, %v616
    %v618 = vshll.u32 2131351028, %v609
    %v619 = vshrl.u32 2102212464, %v610
    %v620 = vor.u32 %v618, %v619
    %v621 = vshll.u32 2102212464, %v609
    %v622 = vshrl.u32 920167782, %v610
    %v623 = vor.u32 %v621, %v622
    %v624 = vshll.u32 920167782, %v609
    %v625 = vshrl.u32 1326507024, %v610
    %v626 = vor.u32 %v624, %v625
    %vm627 = vcmp.lt.s32.totalorder %v608, 1
    %vm628 = vcmp.lt.s32.totalorder %v608, 2
    %vm629 = vcmp.lt.s32.totalorder %v608, 3
    %vm630 = vcmp.lt.s32.totalorder %v608, 4
    %v631 = vsel %vm627, %v611, %v614
    %v632 = vsel %vm630, %v620, 2102212464
    %v633 = vsel %vm629, %v617, %v632
    %v634 = vsel %vm628, %v631, %v633
    %v635 = vsel %vm627, %v614, %v617
    %v636 = vsel %vm630, %v623, 920167782
    %v637 = vsel %vm629, %v620, %v636
    %v638 = vsel %vm628, %v635, %v637
    %v639 = vsel %vm627, %v617, %v620
    %v640 = vsel %vm630, %v626, 1326507024
    %v641 = vsel %vm629, %v623, %v640
    %v642 = vsel %vm628, %v639, %v641
    %v643 = vshll.u32 %v603, 8
    %v644 = vmul.u32.u64.compose %v643, %v642
    %v645 = vextract.low.u32 %v644
    %v646 = vextract.high.u32 %v644
    %v647 = vmul.u32.u64.compose %v643, %v638
    %v648 = vextract.low.u32 %v647
    %v649 = vextract.high.u32 %v647
    %v650 = vmul.u32 %v643, %v634
    %v651 = vadd.s32 %v646, %v648
    %vm652 = vc.u32 %v646, %v648
    %v653 = vadd.s32 %v649, 1
    %v654 = vsel %vm652, %v653, %v649
    %v655 = vadd.s32 %v650, %v654
    %v656 = vadd.s32 %v655, 536870912
    %v657 = vshrl.u32 %v656, 30
    %v658 = vshll.u32 %v657, 30
    %v659 = vsub.s32 %v655, %v658
    %vm660 = vcmp.lt.s32.totalorder %v659, 0
    %v661 = vsub.s32 0, %v659
    %v662 = vsel %vm660, %v661, %v659
    %v663 = vclz %v662
    %v664 = vsub.s32 %v663, 2
    %vm665 = vcmp.gt.s32.totalorder 0, %v664
    %v666 = vsel %vm665, 0, %v664
    %v667 = vsub.s32 32, %v666
    %v668 = vshll.u32 %v659, %v666
    %v669 = vshrl.u32 %v651, %v667
    %v670 = vor.u32 %v668, %v669
    %v671 = vsub.s32 4294967266, %v666
    %v672 = vadd.s32 %v671, 127
    %v673 = vshll.u32 %v672, 23
    %v674 = vor.u32 4788187, %v673
    %v675 = vand.u32 2147483647, %v674
    %v677 = vcvt.s32.f32 %v670
    %v678 = vmul.f32 %v677, %v675
    %v679 = vxor.u32 %v678, 2147483648
    %v680 = vsel %vm597, %v679, %v678
    %v681 = vsub.s32 4, %v657
    %v682 = vsel %vm597, %v681, %v657
    %v683 = vsel %vm596, %v491, %v680
    %v684 = vsel %vm596, 0, %v682
    %v685 = vcosq.f32.pop %v683
    %v686 = vsinq.f32.pop %v683
    %vm687 = vweird.f32 %v491
    %v688 = vadd.s32 %v684, 3
    %v689 = vand.u32 %v688, 3
    %vm690 = vcmp.lt.s32.totalorder %v689, 2
    %vm691 = vcmp.eq.s32.totalorder %v689, 0
    %v692 = vxor.u32 %v686, 2147483648
    %v693 = vsel %vm691, %v685, %v692
    %vm694 = vcmp.eq.s32.totalorder %v689, 2
    %v695 = vxor.u32 %v685, 2147483648
    %v696 = vsel %vm694, %v695, %v686
    %v697 = vsel %vm690, %v693, %v696
    %v698 = vsel %vm687, nan, %v697
    %v699 = vand.u32 2147483647, %v484
    %vm700 = vcmp.le.f32.partialorder %v699, 0.7853982
    %vm701 = vcmp.lt.s32.totalorder %v484, 0
    %v702 = vand.u32 %v484, 2139095040
    %v703 = vshrl.u32 %v702, 23
    %v704 = vsub.s32 %v703, 127
    %v705 = vand.u32 2147483647, %v484
    %v706 = vand.u32 %v705, 8388607
    %v707 = vor.u32 %v706, 8388608
    %v708 = vsub.s32 0, %v707
    %v709 = vadd.s32 %v704, 1
    %vm710 = vcmp.gt.s32.totalorder %v709, 0
    %v711 = vsel %vm710, %v709, 0
    %v712 = vshrl.u32 %v711, 5
    %v713 = vand.u32 %v711, 31
    %v714 = vsub.s32 32, %v713
    %v715 = vshrl.u32 683565275, %v714
    %v716 = vshll.u32 683565275, %v713
    %v717 = vshrl.u32 2475754826, %v714
    %v718 = vor.u32 %v716, %v717
    %v719 = vshll.u32 2475754826, %v713
    %v720 = vshrl.u32 2131351028, %v714
    %v721 = vor.u32 %v719, %v720
    %v722 = vshll.u32 2131351028, %v713
    %v723 = vshrl.u32 2102212464, %v714
    %v724 = vor.u32 %v722, %v723
    %v725 = vshll.u32 2102212464, %v713
    %v726 = vshrl.u32 920167782, %v714
    %v727 = vor.u32 %v725, %v726
    %v728 = vshll.u32 920167782, %v713
    %v729 = vshrl.u32 1326507024, %v714
    %v730 = vor.u32 %v728, %v729
    %vm731 = vcmp.lt.s32.totalorder %v712, 1
    %vm732 = vcmp.lt.s32.totalorder %v712, 2
    %vm733 = vcmp.lt.s32.totalorder %v712, 3
    %vm734 = vcmp.lt.s32.totalorder %v712, 4
    %v735 = vsel %vm731, %v715, %v718
    %v736 = vsel %vm734, %v724, 2102212464
    %v737 = vsel %vm733, %v721, %v736
    %v738 = vsel %vm732, %v735, %v737
    %v739 = vsel %vm731, %v718, %v721
    %v740 = vsel %vm734, %v727, 920167782
    %v741 = vsel %vm733, %v724, %v740
    %v742 = vsel %vm732, %v739, %v741
    %v743 = vsel %vm731, %v721, %v724
    %v744 = vsel %vm734, %v730, 1326507024
    %v745 = vsel %vm733, %v727, %v744
    %v746 = vsel %vm732, %v743, %v745
    %v747 = vshll.u32 %v707, 8
    %v748 = vmul.u32.u64.compose %v747, %v746
    %v749 = vextract.low.u32 %v748
    %v750 = vextract.high.u32 %v748
    %v751 = vmul.u32.u64.compose %v747, %v742
    %v752 = vextract.low.u32 %v751
    %v753 = vextract.high.u32 %v751
    %v754 = vmul.u32 %v747, %v738
    %v755 = vadd.s32 %v750, %v752
    %vm756 = vc.u32 %v750, %v752
    %v757 = vadd.s32 %v753, 1
    %v758 = vsel %vm756, %v757, %v753
    %v759 = vadd.s32 %v754, %v758
    %v760 = vadd.s32 %v759, 536870912
    %v761 = vshrl.u32 %v760, 30
    %v762 = vshll.u32 %v761, 30
    %v763 = vsub.s32 %v759, %v762
    %vm764 = vcmp.lt.s32.totalorder %v763, 0
    %v765 = vsub.s32 0, %v763
    %v766 = vsel %vm764, %v765, %v763
    %v767 = vclz %v766
    %v768 = vsub.s32 %v767, 2
    %vm769 = vcmp.gt.s32.totalorder 0, %v768
    %v770 = vsel %vm769, 0, %v768
    %v771 = vsub.s32 32, %v770
    %v772 = vshll.u32 %v763, %v770
    %v773 = vshrl.u32 %v755, %v771
    %v774 = vor.u32 %v772, %v773
    %v775 = vsub.s32 4294967266, %v770
    %v776 = vadd.s32 %v775, 127
    %v777 = vshll.u32 %v776, 23
    %v778 = vor.u32 4788187, %v777
    %v779 = vand.u32 2147483647, %v778
    %v781 = vcvt.s32.f32 %v774
    %v782 = vmul.f32 %v781, %v779
    %v783 = vxor.u32 %v782, 2147483648
    %v784 = vsel %vm701, %v783, %v782
    %v785 = vsub.s32 4, %v761
    %v786 = vsel %vm701, %v785, %v761
    %v787 = vsel %vm700, %v484, %v784
    %v788 = vsel %vm700, 0, %v786
    %v789 = vcosq.f32.pop %v787
    %v790 = vsinq.f32.pop %v787
    %vm791 = vweird.f32 %v484
    %v792 = vand.u32 %v788, 3
    %vm793 = vcmp.lt.s32.totalorder %v792, 2
    %vm794 = vcmp.eq.s32.totalorder %v792, 0
    %v795 = vxor.u32 %v790, 2147483648
    %v796 = vsel %vm794, %v789, %v795
    %vm797 = vcmp.eq.s32.totalorder %v792, 2
    %v798 = vxor.u32 %v789, 2147483648
    %v799 = vsel %vm797, %v798, %v790
    %v800 = vsel %vm793, %v796, %v799
    %v801 = vsel %vm791, nan, %v800
    %v802 = vand.u32 2147483647, %v484
    %vm803 = vcmp.le.f32.partialorder %v802, 0.7853982
    %vm804 = vcmp.lt.s32.totalorder %v484, 0
    %v805 = vand.u32 %v484, 2139095040
    %v806 = vshrl.u32 %v805, 23
    %v807 = vsub.s32 %v806, 127
    %v808 = vand.u32 2147483647, %v484
    %v809 = vand.u32 %v808, 8388607
    %v810 = vor.u32 %v809, 8388608
    %v811 = vsub.s32 0, %v810
    %v812 = vadd.s32 %v807, 1
    %vm813 = vcmp.gt.s32.totalorder %v812, 0
    %v814 = vsel %vm813, %v812, 0
    %v815 = vshrl.u32 %v814, 5
    %v816 = vand.u32 %v814, 31
    %v817 = vsub.s32 32, %v816
    %v818 = vshrl.u32 683565275, %v817
    %v819 = vshll.u32 683565275, %v816
    %v820 = vshrl.u32 2475754826, %v817
    %v821 = vor.u32 %v819, %v820
    %v822 = vshll.u32 2475754826, %v816
    %v823 = vshrl.u32 2131351028, %v817
    %v824 = vor.u32 %v822, %v823
    %v825 = vshll.u32 2131351028, %v816
    %v826 = vshrl.u32 2102212464, %v817
    %v827 = vor.u32 %v825, %v826
    %v828 = vshll.u32 2102212464, %v816
    %v829 = vshrl.u32 920167782, %v817
    %v830 = vor.u32 %v828, %v829
    %v831 = vshll.u32 920167782, %v816
    %v832 = vshrl.u32 1326507024, %v817
    %v833 = vor.u32 %v831, %v832
    %vm834 = vcmp.lt.s32.totalorder %v815, 1
    %vm835 = vcmp.lt.s32.totalorder %v815, 2
    %vm836 = vcmp.lt.s32.totalorder %v815, 3
    %vm837 = vcmp.lt.s32.totalorder %v815, 4
    %v838 = vsel %vm834, %v818, %v821
    %v839 = vsel %vm837, %v827, 2102212464
    %v840 = vsel %vm836, %v824, %v839
    %v841 = vsel %vm835, %v838, %v840
    %v842 = vsel %vm834, %v821, %v824
    %v843 = vsel %vm837, %v830, 920167782
    %v844 = vsel %vm836, %v827, %v843
    %v845 = vsel %vm835, %v842, %v844
    %v846 = vsel %vm834, %v824, %v827
    %v847 = vsel %vm837, %v833, 1326507024
    %v848 = vsel %vm836, %v830, %v847
    %v849 = vsel %vm835, %v846, %v848
    %v850 = vshll.u32 %v810, 8
    %v851 = vmul.u32.u64.compose %v850, %v849
    %v852 = vextract.low.u32 %v851
    %v853 = vextract.high.u32 %v851
    %v854 = vmul.u32.u64.compose %v850, %v845
    %v855 = vextract.low.u32 %v854
    %v856 = vextract.high.u32 %v854
    %v857 = vmul.u32 %v850, %v841
    %v858 = vadd.s32 %v853, %v855
    %vm859 = vc.u32 %v853, %v855
    %v860 = vadd.s32 %v856, 1
    %v861 = vsel %vm859, %v860, %v856
    %v862 = vadd.s32 %v857, %v861
    %v863 = vadd.s32 %v862, 536870912
    %v864 = vshrl.u32 %v863, 30
    %v865 = vshll.u32 %v864, 30
    %v866 = vsub.s32 %v862, %v865
    %vm867 = vcmp.lt.s32.totalorder %v866, 0
    %v868 = vsub.s32 0, %v866
    %v869 = vsel %vm867, %v868, %v866
    %v870 = vclz %v869
    %v871 = vsub.s32 %v870, 2
    %vm872 = vcmp.gt.s32.totalorder 0, %v871
    %v873 = vsel %vm872, 0, %v871
    %v874 = vsub.s32 32, %v873
    %v875 = vshll.u32 %v866, %v873
    %v876 = vshrl.u32 %v858, %v874
    %v877 = vor.u32 %v875, %v876
    %v878 = vsub.s32 4294967266, %v873
    %v879 = vadd.s32 %v878, 127
    %v880 = vshll.u32 %v879, 23
    %v881 = vor.u32 4788187, %v880
    %v882 = vand.u32 2147483647, %v881
    %v884 = vcvt.s32.f32 %v877
    %v885 = vmul.f32 %v884, %v882
    %v886 = vxor.u32 %v885, 2147483648
    %v887 = vsel %vm804, %v886, %v885
    %v888 = vsub.s32 4, %v864
    %v889 = vsel %vm804, %v888, %v864
    %v890 = vsel %vm803, %v484, %v887
    %v891 = vsel %vm803, 0, %v889
    %v892 = vcosq.f32.pop %v890
    %v893 = vsinq.f32.pop %v890
    %vm894 = vweird.f32 %v484
    %v895 = vadd.s32 %v891, 3
    %v896 = vand.u32 %v895, 3
    %vm897 = vcmp.lt.s32.totalorder %v896, 2
    %vm898 = vcmp.eq.s32.totalorder %v896, 0
    %v899 = vxor.u32 %v893, 2147483648
    %v900 = vsel %vm898, %v892, %v899
    %vm901 = vcmp.eq.s32.totalorder %v896, 2
    %v902 = vxor.u32 %v892, 2147483648
    %v903 = vsel %vm901, %v902, %v893
    %v904 = vsel %vm897, %v900, %v903
    %v905 = vsel %vm894, nan, %v904
    %v906 = vand.u32 2147483647, %v490
    %vm907 = vcmp.le.f32.partialorder %v906, 0.7853982
    %vm908 = vcmp.lt.s32.totalorder %v490, 0
    %v909 = vand.u32 %v490, 2139095040
    %v910 = vshrl.u32 %v909, 23
    %v911 = vsub.s32 %v910, 127
    %v912 = vand.u32 2147483647, %v490
    %v913 = vand.u32 %v912, 8388607
    %v914 = vor.u32 %v913, 8388608
    %v915 = vsub.s32 0, %v914
    %v916 = vadd.s32 %v911, 1
    %vm917 = vcmp.gt.s32.totalorder %v916, 0
    %v918 = vsel %vm917, %v916, 0
    %v919 = vshrl.u32 %v918, 5
    %v920 = vand.u32 %v918, 31
    %v921 = vsub.s32 32, %v920
    %v922 = vshrl.u32 683565275, %v921
    %v923 = vshll.u32 683565275, %v920
    %v924 = vshrl.u32 2475754826, %v921
    %v925 = vor.u32 %v923, %v924
    %v926 = vshll.u32 2475754826, %v920
    %v927 = vshrl.u32 2131351028, %v921
    %v928 = vor.u32 %v926, %v927
    %v929 = vshll.u32 2131351028, %v920
    %v930 = vshrl.u32 2102212464, %v921
    %v931 = vor.u32 %v929, %v930
    %v932 = vshll.u32 2102212464, %v920
    %v933 = vshrl.u32 920167782, %v921
    %v934 = vor.u32 %v932, %v933
    %v935 = vshll.u32 920167782, %v920
    %v936 = vshrl.u32 1326507024, %v921
    %v937 = vor.u32 %v935, %v936
    %vm938 = vcmp.lt.s32.totalorder %v919, 1
    %vm939 = vcmp.lt.s32.totalorder %v919, 2
    %vm940 = vcmp.lt.s32.totalorder %v919, 3
    %vm941 = vcmp.lt.s32.totalorder %v919, 4
    %v942 = vsel %vm938, %v922, %v925
    %v943 = vsel %vm941, %v931, 2102212464
    %v944 = vsel %vm940, %v928, %v943
    %v945 = vsel %vm939, %v942, %v944
    %v946 = vsel %vm938, %v925, %v928
    %v947 = vsel %vm941, %v934, 920167782
    %v948 = vsel %vm940, %v931, %v947
    %v949 = vsel %vm939, %v946, %v948
    %v950 = vsel %vm938, %v928, %v931
    %v951 = vsel %vm941, %v937, 1326507024
    %v952 = vsel %vm940, %v934, %v951
    %v953 = vsel %vm939, %v950, %v952
    %v954 = vshll.u32 %v914, 8
    %v955 = vmul.u32.u64.compose %v954, %v953
    %v956 = vextract.low.u32 %v955
    %v957 = vextract.high.u32 %v955
    %v958 = vmul.u32.u64.compose %v954, %v949
    %v959 = vextract.low.u32 %v958
    %v960 = vextract.high.u32 %v958
    %v961 = vmul.u32 %v954, %v945
    %v962 = vadd.s32 %v957, %v959
    %vm963 = vc.u32 %v957, %v959
    %v964 = vadd.s32 %v960, 1
    %v965 = vsel %vm963, %v964, %v960
    %v966 = vadd.s32 %v961, %v965
    %v967 = vadd.s32 %v966, 536870912
    %v968 = vshrl.u32 %v967, 30
    %v969 = vshll.u32 %v968, 30
    %v970 = vsub.s32 %v966, %v969
    %vm971 = vcmp.lt.s32.totalorder %v970, 0
    %v972 = vsub.s32 0, %v970
    %v973 = vsel %vm971, %v972, %v970
    %v974 = vclz %v973
    %v975 = vsub.s32 %v974, 2
    %vm976 = vcmp.gt.s32.totalorder 0, %v975
    %v977 = vsel %vm976, 0, %v975
    %v978 = vsub.s32 32, %v977
    %v979 = vshll.u32 %v970, %v977
    %v980 = vshrl.u32 %v962, %v978
    %v981 = vor.u32 %v979, %v980
    %v982 = vsub.s32 4294967266, %v977
    %v983 = vadd.s32 %v982, 127
    %v984 = vshll.u32 %v983, 23
    %v985 = vor.u32 4788187, %v984
    %v986 = vand.u32 2147483647, %v985
    %v988 = vcvt.s32.f32 %v981
    %v989 = vmul.f32 %v988, %v986
    %v990 = vxor.u32 %v989, 2147483648
    %v991 = vsel %vm908, %v990, %v989
    %v992 = vsub.s32 4, %v968
    %v993 = vsel %vm908, %v992, %v968
    %v994 = vsel %vm907, %v490, %v991
    %v995 = vsel %vm907, 0, %v993
    %v996 = vcosq.f32.pop %v994
    %v997 = vsinq.f32.pop %v994
    %vm998 = vweird.f32 %v490
    %v999 = vand.u32 %v995, 3
    %vm1000 = vcmp.lt.s32.totalorder %v999, 2
    %vm1001 = vcmp.eq.s32.totalorder %v999, 0
    %v1002 = vxor.u32 %v997, 2147483648
    %v1003 = vsel %vm1001, %v996, %v1002
    %vm1004 = vcmp.eq.s32.totalorder %v999, 2
    %v1005 = vxor.u32 %v996, 2147483648
    %v1006 = vsel %vm1004, %v1005, %v997
    %v1007 = vsel %vm1000, %v1003, %v1006
    %v1008 = vsel %vm998, nan, %v1007
    %v1009 = vand.u32 2147483647, %v490
    %vm1010 = vcmp.le.f32.partialorder %v1009, 0.7853982
    %vm1011 = vcmp.lt.s32.totalorder %v490, 0
    %v1012 = vand.u32 %v490, 2139095040
    %v1013 = vshrl.u32 %v1012, 23
    %v1014 = vsub.s32 %v1013, 127
    %v1015 = vand.u32 2147483647, %v490
    %v1016 = vand.u32 %v1015, 8388607
    %v1017 = vor.u32 %v1016, 8388608
    %v1018 = vsub.s32 0, %v1017
    %v1019 = vadd.s32 %v1014, 1
    %vm1020 = vcmp.gt.s32.totalorder %v1019, 0
    %v1021 = vsel %vm1020, %v1019, 0
    %v1022 = vshrl.u32 %v1021, 5
    %v1023 = vand.u32 %v1021, 31
    %v1024 = vsub.s32 32, %v1023
    %v1025 = vshrl.u32 683565275, %v1024
    %v1026 = vshll.u32 683565275, %v1023
    %v1027 = vshrl.u32 2475754826, %v1024
    %v1028 = vor.u32 %v1026, %v1027
    %v1029 = vshll.u32 2475754826, %v1023
    %v1030 = vshrl.u32 2131351028, %v1024
    %v1031 = vor.u32 %v1029, %v1030
    %v1032 = vshll.u32 2131351028, %v1023
    %v1033 = vshrl.u32 2102212464, %v1024
    %v1034 = vor.u32 %v1032, %v1033
    %v1035 = vshll.u32 2102212464, %v1023
    %v1036 = vshrl.u32 920167782, %v1024
    %v1037 = vor.u32 %v1035, %v1036
    %v1038 = vshll.u32 920167782, %v1023
    %v1039 = vshrl.u32 1326507024, %v1024
    %v1040 = vor.u32 %v1038, %v1039
    %vm1041 = vcmp.lt.s32.totalorder %v1022, 1
    %vm1042 = vcmp.lt.s32.totalorder %v1022, 2
    %vm1043 = vcmp.lt.s32.totalorder %v1022, 3
    %vm1044 = vcmp.lt.s32.totalorder %v1022, 4
    %v1045 = vsel %vm1041, %v1025, %v1028
    %v1046 = vsel %vm1044, %v1034, 2102212464
    %v1047 = vsel %vm1043, %v1031, %v1046
    %v1048 = vsel %vm1042, %v1045, %v1047
    %v1049 = vsel %vm1041, %v1028, %v1031
    %v1050 = vsel %vm1044, %v1037, 920167782
    %v1051 = vsel %vm1043, %v1034, %v1050
    %v1052 = vsel %vm1042, %v1049, %v1051
    %v1053 = vsel %vm1041, %v1031, %v1034
    %v1054 = vsel %vm1044, %v1040, 1326507024
    %v1055 = vsel %vm1043, %v1037, %v1054
    %v1056 = vsel %vm1042, %v1053, %v1055
    %v1057 = vshll.u32 %v1017, 8
    %v1058 = vmul.u32.u64.compose %v1057, %v1056
    %v1059 = vextract.low.u32 %v1058
    %v1060 = vextract.high.u32 %v1058
    %v1061 = vmul.u32.u64.compose %v1057, %v1052
    %v1062 = vextract.low.u32 %v1061
    %v1063 = vextract.high.u32 %v1061
    %v1064 = vmul.u32 %v1057, %v1048
    %v1065 = vadd.s32 %v1060, %v1062
    %vm1066 = vc.u32 %v1060, %v1062
    %v1067 = vadd.s32 %v1063, 1
    %v1068 = vsel %vm1066, %v1067, %v1063
    %v1069 = vadd.s32 %v1064, %v1068
    %v1070 = vadd.s32 %v1069, 536870912
    %v1071 = vshrl.u32 %v1070, 30
    %v1072 = vshll.u32 %v1071, 30
    %v1073 = vsub.s32 %v1069, %v1072
    %vm1074 = vcmp.lt.s32.totalorder %v1073, 0
    %v1075 = vsub.s32 0, %v1073
    %v1076 = vsel %vm1074, %v1075, %v1073
    %v1077 = vclz %v1076
    %v1078 = vsub.s32 %v1077, 2
    %vm1079 = vcmp.gt.s32.totalorder 0, %v1078
    %v1080 = vsel %vm1079, 0, %v1078
    %v1081 = vsub.s32 32, %v1080
    %v1082 = vshll.u32 %v1073, %v1080
    %v1083 = vshrl.u32 %v1065, %v1081
    %v1084 = vor.u32 %v1082, %v1083
    %v1085 = vsub.s32 4294967266, %v1080
    %v1086 = vadd.s32 %v1085, 127
    %v1087 = vshll.u32 %v1086, 23
    %v1088 = vor.u32 4788187, %v1087
    %v1089 = vand.u32 2147483647, %v1088
    %v1091 = vcvt.s32.f32 %v1084
    %v1092 = vmul.f32 %v1091, %v1089
    %v1093 = vxor.u32 %v1092, 2147483648
    %v1094 = vsel %vm1011, %v1093, %v1092
    %v1095 = vsub.s32 4, %v1071
    %v1096 = vsel %vm1011, %v1095, %v1071
    %v1097 = vsel %vm1010, %v490, %v1094
    %v1098 = vsel %vm1010, 0, %v1096
    %v1099 = vcosq.f32.pop %v1097
    %v1100 = vsinq.f32.pop %v1097
    %vm1101 = vweird.f32 %v490
    %v1102 = vadd.s32 %v1098, 3
    %v1103 = vand.u32 %v1102, 3
    %vm1104 = vcmp.lt.s32.totalorder %v1103, 2
    %vm1105 = vcmp.eq.s32.totalorder %v1103, 0
    %v1106 = vxor.u32 %v1100, 2147483648
    %v1107 = vsel %vm1105, %v1099, %v1106
    %vm1108 = vcmp.eq.s32.totalorder %v1103, 2
    %v1109 = vxor.u32 %v1099, 2147483648
    %v1110 = vsel %vm1108, %v1109, %v1100
    %v1111 = vsel %vm1104, %v1107, %v1110
    %v1112 = vsel %vm1101, nan, %v1111
    %v1113 = vmul.f32 %v801, %v1008
    %v1114 = vmul.f32 %v905, %v1112
    %v1115 = vsub.f32 %v1113, %v1114
    %v1116 = vmul.f32 %v905, %v1008
    %v1117 = vmul.f32 %v801, %v1112
    %v1118 = vadd.f32 %v1116, %v1117
    %v1119 = vsub.f32 0.0, %v1008
    %v1120 = vmul.f32 %v1119, %v698
    %v1121 = vsub.f32 0.0, %v1112
    %v1122 = vmul.f32 %v1121, %v698
    %v1123 = vmul.f32 %v801, %v698
    %v1124 = vmul.f32 %v905, %v698
    %v1125 = vmul.f32 %v1115, %v594
    %v1126 = vmul.f32 %v1118, %v594
    %v1127 = vmul.f32 %v594, %v159
    %v1128 = vmul.f32 %v1120, %v471
    %v1129 = vmul.f32 %v1122, %v472
    %v1130 = vsub.f32 %v1128, %v1129
    %v1131 = vadd.f32 %v1127, %v1130
    %v1132 = vmul.f32 %v594, 0.0
    %v1133 = vmul.f32 %v1120, %v472
    %v1134 = vmul.f32 %v1122, %v471
    %v1135 = vadd.f32 %v1133, %v1134
    %v1136 = vadd.f32 %v1132, %v1135
    %v1137 = vmul.f32 %v1123, %v159
    %v1138 = vmul.f32 %v1124, 0.0
    %v1139 = vsub.f32 %v1137, %v1138
    %v1140 = vmul.f32 %v1125, %v471
    %v1141 = vmul.f32 %v1126, %v472
    %v1142 = vsub.f32 %v1140, %v1141
    %v1143 = vadd.f32 %v1139, %v1142
    %v1144 = vmul.f32 %v1123, 0.0
    %v1145 = vmul.f32 %v1124, %v159
    %v1146 = vadd.f32 %v1144, %v1145
    %v1147 = vmul.f32 %v1125, %v472
    %v1148 = vmul.f32 %v1126, %v471
    %v1149 = vadd.f32 %v1147, %v1148
    %v1150 = vadd.f32 %v1146, %v1149
    %v1151 = vmul.f32 %v1131, %v1131
    %v1152 = vmul.f32 %v1136, %v1136
    %v1153 = vadd.f32 %v1151, %v1152
    %v1154 = vmul.f32 %v1143, %v1143
    %v1155 = vmul.f32 %v1150, %v1150
    %v1156 = vadd.f32 %v1154, %v1155
    %v1157 = vmul.f32 %v1131, %v1143
    %v1158 = vmul.f32 %v1136, %v1150
    %v1159 = vadd.f32 %v1157, %v1158
    %v1160 = vmul.f32 %v1136, %v1143
    %v1161 = vmul.f32 %v1131, %v1150
    %v1162 = vsub.f32 %v1160, %v1161
    %v1163 = vsub.f32 0.0, %v1162
    %s1164 = sld [smem:[#allocation2 + $0x3]]
    %v1165 = vstv %s1164
    %v1166 = vmul.f32 %v39, %v1165
    %s1167 = sld [smem:[#allocation4 + $0x3]]
    %v1168 = vstv %s1167
    %v1169 = vadd.f32 %v1166, %v1168
    %s1170 = sld [smem:[#allocation2 + $0x4]]
    %v1171 = vstv %s1170
    %v1172 = vmul.f32 %v41, %v1171
    %s1173 = sld [smem:[#allocation4 + $0x4]]
    %v1174 = vstv %s1173
    %v1175 = vadd.f32 %v1172, %v1174
    %v1176 = vmul.f32 %v1169, 0.5
    %v1177 = vand.u32 2147483647, %v1176
    %vm1178 = vcmp.le.f32.partialorder %v1177, 0.7853982
    %vm1179 = vcmp.lt.s32.totalorder %v1176, 0
    %v1180 = vand.u32 %v1176, 2139095040
    %v1181 = vshrl.u32 %v1180, 23
    %v1182 = vsub.s32 %v1181, 127
    %v1183 = vand.u32 2147483647, %v1176
    %v1184 = vand.u32 %v1183, 8388607
    %v1185 = vor.u32 %v1184, 8388608
    %v1186 = vsub.s32 0, %v1185
    %v1187 = vadd.s32 %v1182, 1
    %vm1188 = vcmp.gt.s32.totalorder %v1187, 0
    %v1189 = vsel %vm1188, %v1187, 0
    %v1190 = vshrl.u32 %v1189, 5
    %v1191 = vand.u32 %v1189, 31
    %v1192 = vsub.s32 32, %v1191
    %v1193 = vshrl.u32 683565275, %v1192
    %v1194 = vshll.u32 683565275, %v1191
    %v1195 = vshrl.u32 2475754826, %v1192
    %v1196 = vor.u32 %v1194, %v1195
    %v1197 = vshll.u32 2475754826, %v1191
    %v1198 = vshrl.u32 2131351028, %v1192
    %v1199 = vor.u32 %v1197, %v1198
    %v1200 = vshll.u32 2131351028, %v1191
    %v1201 = vshrl.u32 2102212464, %v1192
    %v1202 = vor.u32 %v1200, %v1201
    %v1203 = vshll.u32 2102212464, %v1191
    %v1204 = vshrl.u32 920167782, %v1192
    %v1205 = vor.u32 %v1203, %v1204
    %v1206 = vshll.u32 920167782, %v1191
    %v1207 = vshrl.u32 1326507024, %v1192
    %v1208 = vor.u32 %v1206, %v1207
    %vm1209 = vcmp.lt.s32.totalorder %v1190, 1
    %vm1210 = vcmp.lt.s32.totalorder %v1190, 2
    %vm1211 = vcmp.lt.s32.totalorder %v1190, 3
    %vm1212 = vcmp.lt.s32.totalorder %v1190, 4
    %v1213 = vsel %vm1209, %v1193, %v1196
    %v1214 = vsel %vm1212, %v1202, 2102212464
    %v1215 = vsel %vm1211, %v1199, %v1214
    %v1216 = vsel %vm1210, %v1213, %v1215
    %v1217 = vsel %vm1209, %v1196, %v1199
    %v1218 = vsel %vm1212, %v1205, 920167782
    %v1219 = vsel %vm1211, %v1202, %v1218
    %v1220 = vsel %vm1210, %v1217, %v1219
    %v1221 = vsel %vm1209, %v1199, %v1202
    %v1222 = vsel %vm1212, %v1208, 1326507024
    %v1223 = vsel %vm1211, %v1205, %v1222
    %v1224 = vsel %vm1210, %v1221, %v1223
    %v1225 = vshll.u32 %v1185, 8
    %v1226 = vmul.u32.u64.compose %v1225, %v1224
    %v1227 = vextract.low.u32 %v1226
    %v1228 = vextract.high.u32 %v1226
    %v1229 = vmul.u32.u64.compose %v1225, %v1220
    %v1230 = vextract.low.u32 %v1229
    %v1231 = vextract.high.u32 %v1229
    %v1232 = vmul.u32 %v1225, %v1216
    %v1233 = vadd.s32 %v1228, %v1230
    %vm1234 = vc.u32 %v1228, %v1230
    %v1235 = vadd.s32 %v1231, 1
    %v1236 = vsel %vm1234, %v1235, %v1231
    %v1237 = vadd.s32 %v1232, %v1236
    %v1238 = vadd.s32 %v1237, 536870912
    %v1239 = vshrl.u32 %v1238, 30
    %v1240 = vshll.u32 %v1239, 30
    %v1241 = vsub.s32 %v1237, %v1240
    %vm1242 = vcmp.lt.s32.totalorder %v1241, 0
    %v1243 = vsub.s32 0, %v1241
    %v1244 = vsel %vm1242, %v1243, %v1241
    %v1245 = vclz %v1244
    %v1246 = vsub.s32 %v1245, 2
    %vm1247 = vcmp.gt.s32.totalorder 0, %v1246
    %v1248 = vsel %vm1247, 0, %v1246
    %v1249 = vsub.s32 32, %v1248
    %v1250 = vshll.u32 %v1241, %v1248
    %v1251 = vshrl.u32 %v1233, %v1249
    %v1252 = vor.u32 %v1250, %v1251
    %v1253 = vsub.s32 4294967266, %v1248
    %v1254 = vadd.s32 %v1253, 127
    %v1255 = vshll.u32 %v1254, 23
    %v1256 = vor.u32 4788187, %v1255
    %v1257 = vand.u32 2147483647, %v1256
    %v1259 = vcvt.s32.f32 %v1252
    %v1260 = vmul.f32 %v1259, %v1257
    %v1261 = vxor.u32 %v1260, 2147483648
    %v1262 = vsel %vm1179, %v1261, %v1260
    %v1263 = vsub.s32 4, %v1239
    %v1264 = vsel %vm1179, %v1263, %v1239
    %v1265 = vsel %vm1178, %v1176, %v1262
    %v1266 = vsel %vm1178, 0, %v1264
    %v1267 = vcosq.f32.pop %v1265
    %v1268 = vsinq.f32.pop %v1265
    %vm1269 = vweird.f32 %v1176
    %v1270 = vand.u32 %v1266, 3
    %vm1271 = vcmp.lt.s32.totalorder %v1270, 2
    %vm1272 = vcmp.eq.s32.totalorder %v1270, 0
    %v1273 = vxor.u32 %v1268, 2147483648
    %v1274 = vsel %vm1272, %v1267, %v1273
    %vm1275 = vcmp.eq.s32.totalorder %v1270, 2
    %v1276 = vxor.u32 %v1267, 2147483648
    %v1277 = vsel %vm1275, %v1276, %v1268
    %v1278 = vsel %vm1271, %v1274, %v1277
    %v1279 = vsel %vm1269, nan, %v1278
    %v1280 = vand.u32 2147483647, %v1176
    %vm1281 = vcmp.le.f32.partialorder %v1280, 0.7853982
    %vm1282 = vcmp.lt.s32.totalorder %v1176, 0
    %v1283 = vand.u32 %v1176, 2139095040
    %v1284 = vshrl.u32 %v1283, 23
    %v1285 = vsub.s32 %v1284, 127
    %v1286 = vand.u32 2147483647, %v1176
    %v1287 = vand.u32 %v1286, 8388607
    %v1288 = vor.u32 %v1287, 8388608
    %v1289 = vsub.s32 0, %v1288
    %v1290 = vadd.s32 %v1285, 1
    %vm1291 = vcmp.gt.s32.totalorder %v1290, 0
    %v1292 = vsel %vm1291, %v1290, 0
    %v1293 = vshrl.u32 %v1292, 5
    %v1294 = vand.u32 %v1292, 31
    %v1295 = vsub.s32 32, %v1294
    %v1296 = vshrl.u32 683565275, %v1295
    %v1297 = vshll.u32 683565275, %v1294
    %v1298 = vshrl.u32 2475754826, %v1295
    %v1299 = vor.u32 %v1297, %v1298
    %v1300 = vshll.u32 2475754826, %v1294
    %v1301 = vshrl.u32 2131351028, %v1295
    %v1302 = vor.u32 %v1300, %v1301
    %v1303 = vshll.u32 2131351028, %v1294
    %v1304 = vshrl.u32 2102212464, %v1295
    %v1305 = vor.u32 %v1303, %v1304
    %v1306 = vshll.u32 2102212464, %v1294
    %v1307 = vshrl.u32 920167782, %v1295
    %v1308 = vor.u32 %v1306, %v1307
    %v1309 = vshll.u32 920167782, %v1294
    %v1310 = vshrl.u32 1326507024, %v1295
    %v1311 = vor.u32 %v1309, %v1310
    %vm1312 = vcmp.lt.s32.totalorder %v1293, 1
    %vm1313 = vcmp.lt.s32.totalorder %v1293, 2
    %vm1314 = vcmp.lt.s32.totalorder %v1293, 3
    %vm1315 = vcmp.lt.s32.totalorder %v1293, 4
    %v1316 = vsel %vm1312, %v1296, %v1299
    %v1317 = vsel %vm1315, %v1305, 2102212464
    %v1318 = vsel %vm1314, %v1302, %v1317
    %v1319 = vsel %vm1313, %v1316, %v1318
    %v1320 = vsel %vm1312, %v1299, %v1302
    %v1321 = vsel %vm1315, %v1308, 920167782
    %v1322 = vsel %vm1314, %v1305, %v1321
    %v1323 = vsel %vm1313, %v1320, %v1322
    %v1324 = vsel %vm1312, %v1302, %v1305
    %v1325 = vsel %vm1315, %v1311, 1326507024
    %v1326 = vsel %vm1314, %v1308, %v1325
    %v1327 = vsel %vm1313, %v1324, %v1326
    %v1328 = vshll.u32 %v1288, 8
    %v1329 = vmul.u32.u64.compose %v1328, %v1327
    %v1330 = vextract.low.u32 %v1329
    %v1331 = vextract.high.u32 %v1329
    %v1332 = vmul.u32.u64.compose %v1328, %v1323
    %v1333 = vextract.low.u32 %v1332
    %v1334 = vextract.high.u32 %v1332
    %v1335 = vmul.u32 %v1328, %v1319
    %v1336 = vadd.s32 %v1331, %v1333
    %vm1337 = vc.u32 %v1331, %v1333
    %v1338 = vadd.s32 %v1334, 1
    %v1339 = vsel %vm1337, %v1338, %v1334
    %v1340 = vadd.s32 %v1335, %v1339
    %v1341 = vadd.s32 %v1340, 536870912
    %v1342 = vshrl.u32 %v1341, 30
    %v1343 = vshll.u32 %v1342, 30
    %v1344 = vsub.s32 %v1340, %v1343
    %vm1345 = vcmp.lt.s32.totalorder %v1344, 0
    %v1346 = vsub.s32 0, %v1344
    %v1347 = vsel %vm1345, %v1346, %v1344
    %v1348 = vclz %v1347
    %v1349 = vsub.s32 %v1348, 2
    %vm1350 = vcmp.gt.s32.totalorder 0, %v1349
    %v1351 = vsel %vm1350, 0, %v1349
    %v1352 = vsub.s32 32, %v1351
    %v1353 = vshll.u32 %v1344, %v1351
    %v1354 = vshrl.u32 %v1336, %v1352
    %v1355 = vor.u32 %v1353, %v1354
    %v1356 = vsub.s32 4294967266, %v1351
    %v1357 = vadd.s32 %v1356, 127
    %v1358 = vshll.u32 %v1357, 23
    %v1359 = vor.u32 4788187, %v1358
    %v1360 = vand.u32 2147483647, %v1359
    %v1362 = vcvt.s32.f32 %v1355
    %v1363 = vmul.f32 %v1362, %v1360
    %v1364 = vxor.u32 %v1363, 2147483648
    %v1365 = vsel %vm1282, %v1364, %v1363
    %v1366 = vsub.s32 4, %v1342
    %v1367 = vsel %vm1282, %v1366, %v1342
    %v1368 = vsel %vm1281, %v1176, %v1365
    %v1369 = vsel %vm1281, 0, %v1367
    %v1370 = vcosq.f32.pop %v1368
    %v1371 = vsinq.f32.pop %v1368
    %vm1372 = vweird.f32 %v1176
    %v1373 = vadd.s32 %v1369, 3
    %v1374 = vand.u32 %v1373, 3
    %vm1375 = vcmp.lt.s32.totalorder %v1374, 2
    %vm1376 = vcmp.eq.s32.totalorder %v1374, 0
    %v1377 = vxor.u32 %v1371, 2147483648
    %v1378 = vsel %vm1376, %v1370, %v1377
    %vm1379 = vcmp.eq.s32.totalorder %v1374, 2
    %v1380 = vxor.u32 %v1370, 2147483648
    %v1381 = vsel %vm1379, %v1380, %v1371
    %v1382 = vsel %vm1375, %v1378, %v1381
    %v1383 = vsel %vm1372, nan, %v1382
    %v1384 = vand.u32 2147483647, %v1175
    %vm1385 = vcmp.le.f32.partialorder %v1384, 0.7853982
    %vm1386 = vcmp.lt.s32.totalorder %v1175, 0
    %v1387 = vand.u32 %v1175, 2139095040
    %v1388 = vshrl.u32 %v1387, 23
    %v1389 = vsub.s32 %v1388, 127
    %v1390 = vand.u32 2147483647, %v1175
    %v1391 = vand.u32 %v1390, 8388607
    %v1392 = vor.u32 %v1391, 8388608
    %v1393 = vsub.s32 0, %v1392
    %v1394 = vadd.s32 %v1389, 1
    %vm1395 = vcmp.gt.s32.totalorder %v1394, 0
    %v1396 = vsel %vm1395, %v1394, 0
    %v1397 = vshrl.u32 %v1396, 5
    %v1398 = vand.u32 %v1396, 31
    %v1399 = vsub.s32 32, %v1398
    %v1400 = vshrl.u32 683565275, %v1399
    %v1401 = vshll.u32 683565275, %v1398
    %v1402 = vshrl.u32 2475754826, %v1399
    %v1403 = vor.u32 %v1401, %v1402
    %v1404 = vshll.u32 2475754826, %v1398
    %v1405 = vshrl.u32 2131351028, %v1399
    %v1406 = vor.u32 %v1404, %v1405
    %v1407 = vshll.u32 2131351028, %v1398
    %v1408 = vshrl.u32 2102212464, %v1399
    %v1409 = vor.u32 %v1407, %v1408
    %v1410 = vshll.u32 2102212464, %v1398
    %v1411 = vshrl.u32 920167782, %v1399
    %v1412 = vor.u32 %v1410, %v1411
    %v1413 = vshll.u32 920167782, %v1398
    %v1414 = vshrl.u32 1326507024, %v1399
    %v1415 = vor.u32 %v1413, %v1414
    %vm1416 = vcmp.lt.s32.totalorder %v1397, 1
    %vm1417 = vcmp.lt.s32.totalorder %v1397, 2
    %vm1418 = vcmp.lt.s32.totalorder %v1397, 3
    %vm1419 = vcmp.lt.s32.totalorder %v1397, 4
    %v1420 = vsel %vm1416, %v1400, %v1403
    %v1421 = vsel %vm1419, %v1409, 2102212464
    %v1422 = vsel %vm1418, %v1406, %v1421
    %v1423 = vsel %vm1417, %v1420, %v1422
    %v1424 = vsel %vm1416, %v1403, %v1406
    %v1425 = vsel %vm1419, %v1412, 920167782
    %v1426 = vsel %vm1418, %v1409, %v1425
    %v1427 = vsel %vm1417, %v1424, %v1426
    %v1428 = vsel %vm1416, %v1406, %v1409
    %v1429 = vsel %vm1419, %v1415, 1326507024
    %v1430 = vsel %vm1418, %v1412, %v1429
    %v1431 = vsel %vm1417, %v1428, %v1430
    %v1432 = vshll.u32 %v1392, 8
    %v1433 = vmul.u32.u64.compose %v1432, %v1431
    %v1434 = vextract.low.u32 %v1433
    %v1435 = vextract.high.u32 %v1433
    %v1436 = vmul.u32.u64.compose %v1432, %v1427
    %v1437 = vextract.low.u32 %v1436
    %v1438 = vextract.high.u32 %v1436
    %v1439 = vmul.u32 %v1432, %v1423
    %v1440 = vadd.s32 %v1435, %v1437
    %vm1441 = vc.u32 %v1435, %v1437
    %v1442 = vadd.s32 %v1438, 1
    %v1443 = vsel %vm1441, %v1442, %v1438
    %v1444 = vadd.s32 %v1439, %v1443
    %v1445 = vadd.s32 %v1444, 536870912
    %v1446 = vshrl.u32 %v1445, 30
    %v1447 = vshll.u32 %v1446, 30
    %v1448 = vsub.s32 %v1444, %v1447
    %vm1449 = vcmp.lt.s32.totalorder %v1448, 0
    %v1450 = vsub.s32 0, %v1448
    %v1451 = vsel %vm1449, %v1450, %v1448
    %v1452 = vclz %v1451
    %v1453 = vsub.s32 %v1452, 2
    %vm1454 = vcmp.gt.s32.totalorder 0, %v1453
    %v1455 = vsel %vm1454, 0, %v1453
    %v1456 = vsub.s32 32, %v1455
    %v1457 = vshll.u32 %v1448, %v1455
    %v1458 = vshrl.u32 %v1440, %v1456
    %v1459 = vor.u32 %v1457, %v1458
    %v1460 = vsub.s32 4294967266, %v1455
    %v1461 = vadd.s32 %v1460, 127
    %v1462 = vshll.u32 %v1461, 23
    %v1463 = vor.u32 4788187, %v1462
    %v1464 = vand.u32 2147483647, %v1463
    %v1466 = vcvt.s32.f32 %v1459
    %v1467 = vmul.f32 %v1466, %v1464
    %v1468 = vxor.u32 %v1467, 2147483648
    %v1469 = vsel %vm1386, %v1468, %v1467
    %v1470 = vsub.s32 4, %v1446
    %v1471 = vsel %vm1386, %v1470, %v1446
    %v1472 = vsel %vm1385, %v1175, %v1469
    %v1473 = vsel %vm1385, 0, %v1471
    %v1474 = vcosq.f32.pop %v1472
    %v1475 = vsinq.f32.pop %v1472
    %vm1476 = vweird.f32 %v1175
    %v1477 = vand.u32 %v1473, 3
    %vm1478 = vcmp.lt.s32.totalorder %v1477, 2
    %vm1479 = vcmp.eq.s32.totalorder %v1477, 0
    %v1480 = vxor.u32 %v1475, 2147483648
    %v1481 = vsel %vm1479, %v1474, %v1480
    %vm1482 = vcmp.eq.s32.totalorder %v1477, 2
    %v1483 = vxor.u32 %v1474, 2147483648
    %v1484 = vsel %vm1482, %v1483, %v1475
    %v1485 = vsel %vm1478, %v1481, %v1484
    %v1486 = vsel %vm1476, nan, %v1485
    %v1487 = vand.u32 2147483647, %v1175
    %vm1488 = vcmp.le.f32.partialorder %v1487, 0.7853982
    %vm1489 = vcmp.lt.s32.totalorder %v1175, 0
    %v1490 = vand.u32 %v1175, 2139095040
    %v1491 = vshrl.u32 %v1490, 23
    %v1492 = vsub.s32 %v1491, 127
    %v1493 = vand.u32 2147483647, %v1175
    %v1494 = vand.u32 %v1493, 8388607
    %v1495 = vor.u32 %v1494, 8388608
    %v1496 = vsub.s32 0, %v1495
    %v1497 = vadd.s32 %v1492, 1
    %vm1498 = vcmp.gt.s32.totalorder %v1497, 0
    %v1499 = vsel %vm1498, %v1497, 0
    %v1500 = vshrl.u32 %v1499, 5
    %v1501 = vand.u32 %v1499, 31
    %v1502 = vsub.s32 32, %v1501
    %v1503 = vshrl.u32 683565275, %v1502
    %v1504 = vshll.u32 683565275, %v1501
    %v1505 = vshrl.u32 2475754826, %v1502
    %v1506 = vor.u32 %v1504, %v1505
    %v1507 = vshll.u32 2475754826, %v1501
    %v1508 = vshrl.u32 2131351028, %v1502
    %v1509 = vor.u32 %v1507, %v1508
    %v1510 = vshll.u32 2131351028, %v1501
    %v1511 = vshrl.u32 2102212464, %v1502
    %v1512 = vor.u32 %v1510, %v1511
    %v1513 = vshll.u32 2102212464, %v1501
    %v1514 = vshrl.u32 920167782, %v1502
    %v1515 = vor.u32 %v1513, %v1514
    %v1516 = vshll.u32 920167782, %v1501
    %v1517 = vshrl.u32 1326507024, %v1502
    %v1518 = vor.u32 %v1516, %v1517
    %vm1519 = vcmp.lt.s32.totalorder %v1500, 1
    %vm1520 = vcmp.lt.s32.totalorder %v1500, 2
    %vm1521 = vcmp.lt.s32.totalorder %v1500, 3
    %vm1522 = vcmp.lt.s32.totalorder %v1500, 4
    %v1523 = vsel %vm1519, %v1503, %v1506
    %v1524 = vsel %vm1522, %v1512, 2102212464
    %v1525 = vsel %vm1521, %v1509, %v1524
    %v1526 = vsel %vm1520, %v1523, %v1525
    %v1527 = vsel %vm1519, %v1506, %v1509
    %v1528 = vsel %vm1522, %v1515, 920167782
    %v1529 = vsel %vm1521, %v1512, %v1528
    %v1530 = vsel %vm1520, %v1527, %v1529
    %v1531 = vsel %vm1519, %v1509, %v1512
    %v1532 = vsel %vm1522, %v1518, 1326507024
    %v1533 = vsel %vm1521, %v1515, %v1532
    %v1534 = vsel %vm1520, %v1531, %v1533
    %v1535 = vshll.u32 %v1495, 8
    %v1536 = vmul.u32.u64.compose %v1535, %v1534
    %v1537 = vextract.low.u32 %v1536
    %v1538 = vextract.high.u32 %v1536
    %v1539 = vmul.u32.u64.compose %v1535, %v1530
    %v1540 = vextract.low.u32 %v1539
    %v1541 = vextract.high.u32 %v1539
    %v1542 = vmul.u32 %v1535, %v1526
    %v1543 = vadd.s32 %v1538, %v1540
    %vm1544 = vc.u32 %v1538, %v1540
    %v1545 = vadd.s32 %v1541, 1
    %v1546 = vsel %vm1544, %v1545, %v1541
    %v1547 = vadd.s32 %v1542, %v1546
    %v1548 = vadd.s32 %v1547, 536870912
    %v1549 = vshrl.u32 %v1548, 30
    %v1550 = vshll.u32 %v1549, 30
    %v1551 = vsub.s32 %v1547, %v1550
    %vm1552 = vcmp.lt.s32.totalorder %v1551, 0
    %v1553 = vsub.s32 0, %v1551
    %v1554 = vsel %vm1552, %v1553, %v1551
    %v1555 = vclz %v1554
    %v1556 = vsub.s32 %v1555, 2
    %vm1557 = vcmp.gt.s32.totalorder 0, %v1556
    %v1558 = vsel %vm1557, 0, %v1556
    %v1559 = vsub.s32 32, %v1558
    %v1560 = vshll.u32 %v1551, %v1558
    %v1561 = vshrl.u32 %v1543, %v1559
    %v1562 = vor.u32 %v1560, %v1561
    %v1563 = vsub.s32 4294967266, %v1558
    %v1564 = vadd.s32 %v1563, 127
    %v1565 = vshll.u32 %v1564, 23
    %v1566 = vor.u32 4788187, %v1565
    %v1567 = vand.u32 2147483647, %v1566
    %v1569 = vcvt.s32.f32 %v1562
    %v1570 = vmul.f32 %v1569, %v1567
    %v1571 = vxor.u32 %v1570, 2147483648
    %v1572 = vsel %vm1489, %v1571, %v1570
    %v1573 = vsub.s32 4, %v1549
    %v1574 = vsel %vm1489, %v1573, %v1549
    %v1575 = vsel %vm1488, %v1175, %v1572
    %v1576 = vsel %vm1488, 0, %v1574
    %v1577 = vcosq.f32.pop %v1575
    %v1578 = vsinq.f32.pop %v1575
    %vm1579 = vweird.f32 %v1175
    %v1580 = vadd.s32 %v1576, 3
    %v1581 = vand.u32 %v1580, 3
    %vm1582 = vcmp.lt.s32.totalorder %v1581, 2
    %vm1583 = vcmp.eq.s32.totalorder %v1581, 0
    %v1584 = vxor.u32 %v1578, 2147483648
    %v1585 = vsel %vm1583, %v1577, %v1584
    %vm1586 = vcmp.eq.s32.totalorder %v1581, 2
    %v1587 = vxor.u32 %v1577, 2147483648
    %v1588 = vsel %vm1586, %v1587, %v1578
    %v1589 = vsel %vm1582, %v1585, %v1588
    %v1590 = vsel %vm1579, nan, %v1589
    %v1591 = vmul.f32 %v1486, %v1383
    %v1592 = vmul.f32 %v1590, %v1383
    %s1593 = sld [smem:[#allocation2 + $0x9]]
    %v1594 = vstv %s1593
    %v1595 = vmul.f32 %v39, %v1594
    %s1596 = sld [smem:[#allocation4 + $0x9]]
    %v1597 = vstv %s1596
    %v1598 = vadd.f32 %v1595, %v1597
    %s1599 = sld [smem:[#allocation2 + $0xa]]
    %v1600 = vstv %s1599
    %v1601 = vmul.f32 %v41, %v1600
    %s1602 = sld [smem:[#allocation4 + $0xa]]
    %v1603 = vstv %s1602
    %v1604 = vadd.f32 %v1601, %v1603
    %s1605 = sld [smem:[#allocation2 + $0xb]]
    %v1606 = vstv %s1605
    %v1607 = vmul.f32 %v43, %v1606
    %s1608 = sld [smem:[#allocation4 + $0xb]]
    %v1609 = vstv %s1608
    %v1610 = vadd.f32 %v1607, %v1609
    %v1611 = vmul.f32 %v1598, 0.5
    %v1612 = vand.u32 2147483647, %v1611
    %vm1613 = vcmp.le.f32.partialorder %v1612, 0.7853982
    %vm1614 = vcmp.lt.s32.totalorder %v1611, 0
    %v1615 = vand.u32 %v1611, 2139095040
    %v1616 = vshrl.u32 %v1615, 23
    %v1617 = vsub.s32 %v1616, 127
    %v1618 = vand.u32 2147483647, %v1611
    %v1619 = vand.u32 %v1618, 8388607
    %v1620 = vor.u32 %v1619, 8388608
    %v1621 = vsub.s32 0, %v1620
    %v1622 = vadd.s32 %v1617, 1
    %vm1623 = vcmp.gt.s32.totalorder %v1622, 0
    %v1624 = vsel %vm1623, %v1622, 0
    %v1625 = vshrl.u32 %v1624, 5
    %v1626 = vand.u32 %v1624, 31
    %v1627 = vsub.s32 32, %v1626
    %v1628 = vshrl.u32 683565275, %v1627
    %v1629 = vshll.u32 683565275, %v1626
    %v1630 = vshrl.u32 2475754826, %v1627
    %v1631 = vor.u32 %v1629, %v1630
    %v1632 = vshll.u32 2475754826, %v1626
    %v1633 = vshrl.u32 2131351028, %v1627
    %v1634 = vor.u32 %v1632, %v1633
    %v1635 = vshll.u32 2131351028, %v1626
    %v1636 = vshrl.u32 2102212464, %v1627
    %v1637 = vor.u32 %v1635, %v1636
    %v1638 = vshll.u32 2102212464, %v1626
    %v1639 = vshrl.u32 920167782, %v1627
    %v1640 = vor.u32 %v1638, %v1639
    %v1641 = vshll.u32 920167782, %v1626
    %v1642 = vshrl.u32 1326507024, %v1627
    %v1643 = vor.u32 %v1641, %v1642
    %vm1644 = vcmp.lt.s32.totalorder %v1625, 1
    %vm1645 = vcmp.lt.s32.totalorder %v1625, 2
    %vm1646 = vcmp.lt.s32.totalorder %v1625, 3
    %vm1647 = vcmp.lt.s32.totalorder %v1625, 4
    %v1648 = vsel %vm1644, %v1628, %v1631
    %v1649 = vsel %vm1647, %v1637, 2102212464
    %v1650 = vsel %vm1646, %v1634, %v1649
    %v1651 = vsel %vm1645, %v1648, %v1650
    %v1652 = vsel %vm1644, %v1631, %v1634
    %v1653 = vsel %vm1647, %v1640, 920167782
    %v1654 = vsel %vm1646, %v1637, %v1653
    %v1655 = vsel %vm1645, %v1652, %v1654
    %v1656 = vsel %vm1644, %v1634, %v1637
    %v1657 = vsel %vm1647, %v1643, 1326507024
    %v1658 = vsel %vm1646, %v1640, %v1657
    %v1659 = vsel %vm1645, %v1656, %v1658
    %v1660 = vshll.u32 %v1620, 8
    %v1661 = vmul.u32.u64.compose %v1660, %v1659
    %v1662 = vextract.low.u32 %v1661
    %v1663 = vextract.high.u32 %v1661
    %v1664 = vmul.u32.u64.compose %v1660, %v1655
    %v1665 = vextract.low.u32 %v1664
    %v1666 = vextract.high.u32 %v1664
    %v1667 = vmul.u32 %v1660, %v1651
    %v1668 = vadd.s32 %v1663, %v1665
    %vm1669 = vc.u32 %v1663, %v1665
    %v1670 = vadd.s32 %v1666, 1
    %v1671 = vsel %vm1669, %v1670, %v1666
    %v1672 = vadd.s32 %v1667, %v1671
    %v1673 = vadd.s32 %v1672, 536870912
    %v1674 = vshrl.u32 %v1673, 30
    %v1675 = vshll.u32 %v1674, 30
    %v1676 = vsub.s32 %v1672, %v1675
    %vm1677 = vcmp.lt.s32.totalorder %v1676, 0
    %v1678 = vsub.s32 0, %v1676
    %v1679 = vsel %vm1677, %v1678, %v1676
    %v1680 = vclz %v1679
    %v1681 = vsub.s32 %v1680, 2
    %vm1682 = vcmp.gt.s32.totalorder 0, %v1681
    %v1683 = vsel %vm1682, 0, %v1681
    %v1684 = vsub.s32 32, %v1683
    %v1685 = vshll.u32 %v1676, %v1683
    %v1686 = vshrl.u32 %v1668, %v1684
    %v1687 = vor.u32 %v1685, %v1686
    %v1688 = vsub.s32 4294967266, %v1683
    %v1689 = vadd.s32 %v1688, 127
    %v1690 = vshll.u32 %v1689, 23
    %v1691 = vor.u32 4788187, %v1690
    %v1692 = vand.u32 2147483647, %v1691
    %v1694 = vcvt.s32.f32 %v1687
    %v1695 = vmul.f32 %v1694, %v1692
    %v1696 = vxor.u32 %v1695, 2147483648
    %v1697 = vsel %vm1614, %v1696, %v1695
    %v1698 = vsub.s32 4, %v1674
    %v1699 = vsel %vm1614, %v1698, %v1674
    %v1700 = vsel %vm1613, %v1611, %v1697
    %v1701 = vsel %vm1613, 0, %v1699
    %v1702 = vcosq.f32.pop %v1700
    %v1703 = vsinq.f32.pop %v1700
    %vm1704 = vweird.f32 %v1611
    %v1705 = vand.u32 %v1701, 3
    %vm1706 = vcmp.lt.s32.totalorder %v1705, 2
    %vm1707 = vcmp.eq.s32.totalorder %v1705, 0
    %v1708 = vxor.u32 %v1703, 2147483648
    %v1709 = vsel %vm1707, %v1702, %v1708
    %vm1710 = vcmp.eq.s32.totalorder %v1705, 2
    %v1711 = vxor.u32 %v1702, 2147483648
    %v1712 = vsel %vm1710, %v1711, %v1703
    %v1713 = vsel %vm1706, %v1709, %v1712
    %v1714 = vsel %vm1704, nan, %v1713
    %v1715 = vand.u32 2147483647, %v1611
    %vm1716 = vcmp.le.f32.partialorder %v1715, 0.7853982
    %vm1717 = vcmp.lt.s32.totalorder %v1611, 0
    %v1718 = vand.u32 %v1611, 2139095040
    %v1719 = vshrl.u32 %v1718, 23
    %v1720 = vsub.s32 %v1719, 127
    %v1721 = vand.u32 2147483647, %v1611
    %v1722 = vand.u32 %v1721, 8388607
    %v1723 = vor.u32 %v1722, 8388608
    %v1724 = vsub.s32 0, %v1723
    %v1725 = vadd.s32 %v1720, 1
    %vm1726 = vcmp.gt.s32.totalorder %v1725, 0
    %v1727 = vsel %vm1726, %v1725, 0
    %v1728 = vshrl.u32 %v1727, 5
    %v1729 = vand.u32 %v1727, 31
    %v1730 = vsub.s32 32, %v1729
    %v1731 = vshrl.u32 683565275, %v1730
    %v1732 = vshll.u32 683565275, %v1729
    %v1733 = vshrl.u32 2475754826, %v1730
    %v1734 = vor.u32 %v1732, %v1733
    %v1735 = vshll.u32 2475754826, %v1729
    %v1736 = vshrl.u32 2131351028, %v1730
    %v1737 = vor.u32 %v1735, %v1736
    %v1738 = vshll.u32 2131351028, %v1729
    %v1739 = vshrl.u32 2102212464, %v1730
    %v1740 = vor.u32 %v1738, %v1739
    %v1741 = vshll.u32 2102212464, %v1729
    %v1742 = vshrl.u32 920167782, %v1730
    %v1743 = vor.u32 %v1741, %v1742
    %v1744 = vshll.u32 920167782, %v1729
    %v1745 = vshrl.u32 1326507024, %v1730
    %v1746 = vor.u32 %v1744, %v1745
    %vm1747 = vcmp.lt.s32.totalorder %v1728, 1
    %vm1748 = vcmp.lt.s32.totalorder %v1728, 2
    %vm1749 = vcmp.lt.s32.totalorder %v1728, 3
    %vm1750 = vcmp.lt.s32.totalorder %v1728, 4
    %v1751 = vsel %vm1747, %v1731, %v1734
    %v1752 = vsel %vm1750, %v1740, 2102212464
    %v1753 = vsel %vm1749, %v1737, %v1752
    %v1754 = vsel %vm1748, %v1751, %v1753
    %v1755 = vsel %vm1747, %v1734, %v1737
    %v1756 = vsel %vm1750, %v1743, 920167782
    %v1757 = vsel %vm1749, %v1740, %v1756
    %v1758 = vsel %vm1748, %v1755, %v1757
    %v1759 = vsel %vm1747, %v1737, %v1740
    %v1760 = vsel %vm1750, %v1746, 1326507024
    %v1761 = vsel %vm1749, %v1743, %v1760
    %v1762 = vsel %vm1748, %v1759, %v1761
    %v1763 = vshll.u32 %v1723, 8
    %v1764 = vmul.u32.u64.compose %v1763, %v1762
    %v1765 = vextract.low.u32 %v1764
    %v1766 = vextract.high.u32 %v1764
    %v1767 = vmul.u32.u64.compose %v1763, %v1758
    %v1768 = vextract.low.u32 %v1767
    %v1769 = vextract.high.u32 %v1767
    %v1770 = vmul.u32 %v1763, %v1754
    %v1771 = vadd.s32 %v1766, %v1768
    %vm1772 = vc.u32 %v1766, %v1768
    %v1773 = vadd.s32 %v1769, 1
    %v1774 = vsel %vm1772, %v1773, %v1769
    %v1775 = vadd.s32 %v1770, %v1774
    %v1776 = vadd.s32 %v1775, 536870912
    %v1777 = vshrl.u32 %v1776, 30
    %v1778 = vshll.u32 %v1777, 30
    %v1779 = vsub.s32 %v1775, %v1778
    %vm1780 = vcmp.lt.s32.totalorder %v1779, 0
    %v1781 = vsub.s32 0, %v1779
    %v1782 = vsel %vm1780, %v1781, %v1779
    %v1783 = vclz %v1782
    %v1784 = vsub.s32 %v1783, 2
    %vm1785 = vcmp.gt.s32.totalorder 0, %v1784
    %v1786 = vsel %vm1785, 0, %v1784
    %v1787 = vsub.s32 32, %v1786
    %v1788 = vshll.u32 %v1779, %v1786
    %v1789 = vshrl.u32 %v1771, %v1787
    %v1790 = vor.u32 %v1788, %v1789
    %v1791 = vsub.s32 4294967266, %v1786
    %v1792 = vadd.s32 %v1791, 127
    %v1793 = vshll.u32 %v1792, 23
    %v1794 = vor.u32 4788187, %v1793
    %v1795 = vand.u32 2147483647, %v1794
    %v1797 = vcvt.s32.f32 %v1790
    %v1798 = vmul.f32 %v1797, %v1795
    %v1799 = vxor.u32 %v1798, 2147483648
    %v1800 = vsel %vm1717, %v1799, %v1798
    %v1801 = vsub.s32 4, %v1777
    %v1802 = vsel %vm1717, %v1801, %v1777
    %v1803 = vsel %vm1716, %v1611, %v1800
    %v1804 = vsel %vm1716, 0, %v1802
    %v1805 = vcosq.f32.pop %v1803
    %v1806 = vsinq.f32.pop %v1803
    %vm1807 = vweird.f32 %v1611
    %v1808 = vadd.s32 %v1804, 3
    %v1809 = vand.u32 %v1808, 3
    %vm1810 = vcmp.lt.s32.totalorder %v1809, 2
    %vm1811 = vcmp.eq.s32.totalorder %v1809, 0
    %v1812 = vxor.u32 %v1806, 2147483648
    %v1813 = vsel %vm1811, %v1805, %v1812
    %vm1814 = vcmp.eq.s32.totalorder %v1809, 2
    %v1815 = vxor.u32 %v1805, 2147483648
    %v1816 = vsel %vm1814, %v1815, %v1806
    %v1817 = vsel %vm1810, %v1813, %v1816
    %v1818 = vsel %vm1807, nan, %v1817
    %v1819 = vand.u32 2147483647, %v1604
    %vm1820 = vcmp.le.f32.partialorder %v1819, 0.7853982
    %vm1821 = vcmp.lt.s32.totalorder %v1604, 0
    %v1822 = vand.u32 %v1604, 2139095040
    %v1823 = vshrl.u32 %v1822, 23
    %v1824 = vsub.s32 %v1823, 127
    %v1825 = vand.u32 2147483647, %v1604
    %v1826 = vand.u32 %v1825, 8388607
    %v1827 = vor.u32 %v1826, 8388608
    %v1828 = vsub.s32 0, %v1827
    %v1829 = vadd.s32 %v1824, 1
    %vm1830 = vcmp.gt.s32.totalorder %v1829, 0
    %v1831 = vsel %vm1830, %v1829, 0
    %v1832 = vshrl.u32 %v1831, 5
    %v1833 = vand.u32 %v1831, 31
    %v1834 = vsub.s32 32, %v1833
    %v1835 = vshrl.u32 683565275, %v1834
    %v1836 = vshll.u32 683565275, %v1833
    %v1837 = vshrl.u32 2475754826, %v1834
    %v1838 = vor.u32 %v1836, %v1837
    %v1839 = vshll.u32 2475754826, %v1833
    %v1840 = vshrl.u32 2131351028, %v1834
    %v1841 = vor.u32 %v1839, %v1840
    %v1842 = vshll.u32 2131351028, %v1833
    %v1843 = vshrl.u32 2102212464, %v1834
    %v1844 = vor.u32 %v1842, %v1843
    %v1845 = vshll.u32 2102212464, %v1833
    %v1846 = vshrl.u32 920167782, %v1834
    %v1847 = vor.u32 %v1845, %v1846
    %v1848 = vshll.u32 920167782, %v1833
    %v1849 = vshrl.u32 1326507024, %v1834
    %v1850 = vor.u32 %v1848, %v1849
    %vm1851 = vcmp.lt.s32.totalorder %v1832, 1
    %vm1852 = vcmp.lt.s32.totalorder %v1832, 2
    %vm1853 = vcmp.lt.s32.totalorder %v1832, 3
    %vm1854 = vcmp.lt.s32.totalorder %v1832, 4
    %v1855 = vsel %vm1851, %v1835, %v1838
    %v1856 = vsel %vm1854, %v1844, 2102212464
    %v1857 = vsel %vm1853, %v1841, %v1856
    %v1858 = vsel %vm1852, %v1855, %v1857
    %v1859 = vsel %vm1851, %v1838, %v1841
    %v1860 = vsel %vm1854, %v1847, 920167782
    %v1861 = vsel %vm1853, %v1844, %v1860
    %v1862 = vsel %vm1852, %v1859, %v1861
    %v1863 = vsel %vm1851, %v1841, %v1844
    %v1864 = vsel %vm1854, %v1850, 1326507024
    %v1865 = vsel %vm1853, %v1847, %v1864
    %v1866 = vsel %vm1852, %v1863, %v1865
    %v1867 = vshll.u32 %v1827, 8
    %v1868 = vmul.u32.u64.compose %v1867, %v1866
    %v1869 = vextract.low.u32 %v1868
    %v1870 = vextract.high.u32 %v1868
    %v1871 = vmul.u32.u64.compose %v1867, %v1862
    %v1872 = vextract.low.u32 %v1871
    %v1873 = vextract.high.u32 %v1871
    %v1874 = vmul.u32 %v1867, %v1858
    %v1875 = vadd.s32 %v1870, %v1872
    %vm1876 = vc.u32 %v1870, %v1872
    %v1877 = vadd.s32 %v1873, 1
    %v1878 = vsel %vm1876, %v1877, %v1873
    %v1879 = vadd.s32 %v1874, %v1878
    %v1880 = vadd.s32 %v1879, 536870912
    %v1881 = vshrl.u32 %v1880, 30
    %v1882 = vshll.u32 %v1881, 30
    %v1883 = vsub.s32 %v1879, %v1882
    %vm1884 = vcmp.lt.s32.totalorder %v1883, 0
    %v1885 = vsub.s32 0, %v1883
    %v1886 = vsel %vm1884, %v1885, %v1883
    %v1887 = vclz %v1886
    %v1888 = vsub.s32 %v1887, 2
    %vm1889 = vcmp.gt.s32.totalorder 0, %v1888
    %v1890 = vsel %vm1889, 0, %v1888
    %v1891 = vsub.s32 32, %v1890
    %v1892 = vshll.u32 %v1883, %v1890
    %v1893 = vshrl.u32 %v1875, %v1891
    %v1894 = vor.u32 %v1892, %v1893
    %v1895 = vsub.s32 4294967266, %v1890
    %v1896 = vadd.s32 %v1895, 127
    %v1897 = vshll.u32 %v1896, 23
    %v1898 = vor.u32 4788187, %v1897
    %v1899 = vand.u32 2147483647, %v1898
    %v1901 = vcvt.s32.f32 %v1894
    %v1902 = vmul.f32 %v1901, %v1899
    %v1903 = vxor.u32 %v1902, 2147483648
    %v1904 = vsel %vm1821, %v1903, %v1902
    %v1905 = vsub.s32 4, %v1881
    %v1906 = vsel %vm1821, %v1905, %v1881
    %v1907 = vsel %vm1820, %v1604, %v1904
    %v1908 = vsel %vm1820, 0, %v1906
    %v1909 = vcosq.f32.pop %v1907
    %v1910 = vsinq.f32.pop %v1907
    %vm1911 = vweird.f32 %v1604
    %v1912 = vand.u32 %v1908, 3
    %vm1913 = vcmp.lt.s32.totalorder %v1912, 2
    %vm1914 = vcmp.eq.s32.totalorder %v1912, 0
    %v1915 = vxor.u32 %v1910, 2147483648
    %v1916 = vsel %vm1914, %v1909, %v1915
    %vm1917 = vcmp.eq.s32.totalorder %v1912, 2
    %v1918 = vxor.u32 %v1909, 2147483648
    %v1919 = vsel %vm1917, %v1918, %v1910
    %v1920 = vsel %vm1913, %v1916, %v1919
    %v1921 = vsel %vm1911, nan, %v1920
    %v1922 = vand.u32 2147483647, %v1604
    %vm1923 = vcmp.le.f32.partialorder %v1922, 0.7853982
    %vm1924 = vcmp.lt.s32.totalorder %v1604, 0
    %v1925 = vand.u32 %v1604, 2139095040
    %v1926 = vshrl.u32 %v1925, 23
    %v1927 = vsub.s32 %v1926, 127
    %v1928 = vand.u32 2147483647, %v1604
    %v1929 = vand.u32 %v1928, 8388607
    %v1930 = vor.u32 %v1929, 8388608
    %v1931 = vsub.s32 0, %v1930
    %v1932 = vadd.s32 %v1927, 1
    %vm1933 = vcmp.gt.s32.totalorder %v1932, 0
    %v1934 = vsel %vm1933, %v1932, 0
    %v1935 = vshrl.u32 %v1934, 5
    %v1936 = vand.u32 %v1934, 31
    %v1937 = vsub.s32 32, %v1936
    %v1938 = vshrl.u32 683565275, %v1937
    %v1939 = vshll.u32 683565275, %v1936
    %v1940 = vshrl.u32 2475754826, %v1937
    %v1941 = vor.u32 %v1939, %v1940
    %v1942 = vshll.u32 2475754826, %v1936
    %v1943 = vshrl.u32 2131351028, %v1937
    %v1944 = vor.u32 %v1942, %v1943
    %v1945 = vshll.u32 2131351028, %v1936
    %v1946 = vshrl.u32 2102212464, %v1937
    %v1947 = vor.u32 %v1945, %v1946
    %v1948 = vshll.u32 2102212464, %v1936
    %v1949 = vshrl.u32 920167782, %v1937
    %v1950 = vor.u32 %v1948, %v1949
    %v1951 = vshll.u32 920167782, %v1936
    %v1952 = vshrl.u32 1326507024, %v1937
    %v1953 = vor.u32 %v1951, %v1952
    %vm1954 = vcmp.lt.s32.totalorder %v1935, 1
    %vm1955 = vcmp.lt.s32.totalorder %v1935, 2
    %vm1956 = vcmp.lt.s32.totalorder %v1935, 3
    %vm1957 = vcmp.lt.s32.totalorder %v1935, 4
    %v1958 = vsel %vm1954, %v1938, %v1941
    %v1959 = vsel %vm1957, %v1947, 2102212464
    %v1960 = vsel %vm1956, %v1944, %v1959
    %v1961 = vsel %vm1955, %v1958, %v1960
    %v1962 = vsel %vm1954, %v1941, %v1944
    %v1963 = vsel %vm1957, %v1950, 920167782
    %v1964 = vsel %vm1956, %v1947, %v1963
    %v1965 = vsel %vm1955, %v1962, %v1964
    %v1966 = vsel %vm1954, %v1944, %v1947
    %v1967 = vsel %vm1957, %v1953, 1326507024
    %v1968 = vsel %vm1956, %v1950, %v1967
    %v1969 = vsel %vm1955, %v1966, %v1968
    %v1970 = vshll.u32 %v1930, 8
    %v1971 = vmul.u32.u64.compose %v1970, %v1969
    %v1972 = vextract.low.u32 %v1971
    %v1973 = vextract.high.u32 %v1971
    %v1974 = vmul.u32.u64.compose %v1970, %v1965
    %v1975 = vextract.low.u32 %v1974
    %v1976 = vextract.high.u32 %v1974
    %v1977 = vmul.u32 %v1970, %v1961
    %v1978 = vadd.s32 %v1973, %v1975
    %vm1979 = vc.u32 %v1973, %v1975
    %v1980 = vadd.s32 %v1976, 1
    %v1981 = vsel %vm1979, %v1980, %v1976
    %v1982 = vadd.s32 %v1977, %v1981
    %v1983 = vadd.s32 %v1982, 536870912
    %v1984 = vshrl.u32 %v1983, 30
    %v1985 = vshll.u32 %v1984, 30
    %v1986 = vsub.s32 %v1982, %v1985
    %vm1987 = vcmp.lt.s32.totalorder %v1986, 0
    %v1988 = vsub.s32 0, %v1986
    %v1989 = vsel %vm1987, %v1988, %v1986
    %v1990 = vclz %v1989
    %v1991 = vsub.s32 %v1990, 2
    %vm1992 = vcmp.gt.s32.totalorder 0, %v1991
    %v1993 = vsel %vm1992, 0, %v1991
    %v1994 = vsub.s32 32, %v1993
    %v1995 = vshll.u32 %v1986, %v1993
    %v1996 = vshrl.u32 %v1978, %v1994
    %v1997 = vor.u32 %v1995, %v1996
    %v1998 = vsub.s32 4294967266, %v1993
    %v1999 = vadd.s32 %v1998, 127
    %v2000 = vshll.u32 %v1999, 23
    %v2001 = vor.u32 4788187, %v2000
    %v2002 = vand.u32 2147483647, %v2001
    %v2004 = vcvt.s32.f32 %v1997
    %v2005 = vmul.f32 %v2004, %v2002
    %v2006 = vxor.u32 %v2005, 2147483648
    %v2007 = vsel %vm1924, %v2006, %v2005
    %v2008 = vsub.s32 4, %v1984
    %v2009 = vsel %vm1924, %v2008, %v1984
    %v2010 = vsel %vm1923, %v1604, %v2007
    %v2011 = vsel %vm1923, 0, %v2009
    %v2012 = vcosq.f32.pop %v2010
    %v2013 = vsinq.f32.pop %v2010
    %vm2014 = vweird.f32 %v1604
    %v2015 = vadd.s32 %v2011, 3
    %v2016 = vand.u32 %v2015, 3
    %vm2017 = vcmp.lt.s32.totalorder %v2016, 2
    %vm2018 = vcmp.eq.s32.totalorder %v2016, 0
    %v2019 = vxor.u32 %v2013, 2147483648
    %v2020 = vsel %vm2018, %v2012, %v2019
    %vm2021 = vcmp.eq.s32.totalorder %v2016, 2
    %v2022 = vxor.u32 %v2012, 2147483648
    %v2023 = vsel %vm2021, %v2022, %v2013
    %v2024 = vsel %vm2017, %v2020, %v2023
    %v2025 = vsel %vm2014, nan, %v2024
    %v2026 = vand.u32 2147483647, %v1610
    %vm2027 = vcmp.le.f32.partialorder %v2026, 0.7853982
    %vm2028 = vcmp.lt.s32.totalorder %v1610, 0
    %v2029 = vand.u32 %v1610, 2139095040
    %v2030 = vshrl.u32 %v2029, 23
    %v2031 = vsub.s32 %v2030, 127
    %v2032 = vand.u32 2147483647, %v1610
    %v2033 = vand.u32 %v2032, 8388607
    %v2034 = vor.u32 %v2033, 8388608
    %v2035 = vsub.s32 0, %v2034
    %v2036 = vadd.s32 %v2031, 1
    %vm2037 = vcmp.gt.s32.totalorder %v2036, 0
    %v2038 = vsel %vm2037, %v2036, 0
    %v2039 = vshrl.u32 %v2038, 5
    %v2040 = vand.u32 %v2038, 31
    %v2041 = vsub.s32 32, %v2040
    %v2042 = vshrl.u32 683565275, %v2041
    %v2043 = vshll.u32 683565275, %v2040
    %v2044 = vshrl.u32 2475754826, %v2041
    %v2045 = vor.u32 %v2043, %v2044
    %v2046 = vshll.u32 2475754826, %v2040
    %v2047 = vshrl.u32 2131351028, %v2041
    %v2048 = vor.u32 %v2046, %v2047
    %v2049 = vshll.u32 2131351028, %v2040
    %v2050 = vshrl.u32 2102212464, %v2041
    %v2051 = vor.u32 %v2049, %v2050
    %v2052 = vshll.u32 2102212464, %v2040
    %v2053 = vshrl.u32 920167782, %v2041
    %v2054 = vor.u32 %v2052, %v2053
    %v2055 = vshll.u32 920167782, %v2040
    %v2056 = vshrl.u32 1326507024, %v2041
    %v2057 = vor.u32 %v2055, %v2056
    %vm2058 = vcmp.lt.s32.totalorder %v2039, 1
    %vm2059 = vcmp.lt.s32.totalorder %v2039, 2
    %vm2060 = vcmp.lt.s32.totalorder %v2039, 3
    %vm2061 = vcmp.lt.s32.totalorder %v2039, 4
    %v2062 = vsel %vm2058, %v2042, %v2045
    %v2063 = vsel %vm2061, %v2051, 2102212464
    %v2064 = vsel %vm2060, %v2048, %v2063
    %v2065 = vsel %vm2059, %v2062, %v2064
    %v2066 = vsel %vm2058, %v2045, %v2048
    %v2067 = vsel %vm2061, %v2054, 920167782
    %v2068 = vsel %vm2060, %v2051, %v2067
    %v2069 = vsel %vm2059, %v2066, %v2068
    %v2070 = vsel %vm2058, %v2048, %v2051
    %v2071 = vsel %vm2061, %v2057, 1326507024
    %v2072 = vsel %vm2060, %v2054, %v2071
    %v2073 = vsel %vm2059, %v2070, %v2072
    %v2074 = vshll.u32 %v2034, 8
    %v2075 = vmul.u32.u64.compose %v2074, %v2073
    %v2076 = vextract.low.u32 %v2075
    %v2077 = vextract.high.u32 %v2075
    %v2078 = vmul.u32.u64.compose %v2074, %v2069
    %v2079 = vextract.low.u32 %v2078
    %v2080 = vextract.high.u32 %v2078
    %v2081 = vmul.u32 %v2074, %v2065
    %v2082 = vadd.s32 %v2077, %v2079
    %vm2083 = vc.u32 %v2077, %v2079
    %v2084 = vadd.s32 %v2080, 1
    %v2085 = vsel %vm2083, %v2084, %v2080
    %v2086 = vadd.s32 %v2081, %v2085
    %v2087 = vadd.s32 %v2086, 536870912
    %v2088 = vshrl.u32 %v2087, 30
    %v2089 = vshll.u32 %v2088, 30
    %v2090 = vsub.s32 %v2086, %v2089
    %vm2091 = vcmp.lt.s32.totalorder %v2090, 0
    %v2092 = vsub.s32 0, %v2090
    %v2093 = vsel %vm2091, %v2092, %v2090
    %v2094 = vclz %v2093
    %v2095 = vsub.s32 %v2094, 2
    %vm2096 = vcmp.gt.s32.totalorder 0, %v2095
    %v2097 = vsel %vm2096, 0, %v2095
    %v2098 = vsub.s32 32, %v2097
    %v2099 = vshll.u32 %v2090, %v2097
    %v2100 = vshrl.u32 %v2082, %v2098
    %v2101 = vor.u32 %v2099, %v2100
    %v2102 = vsub.s32 4294967266, %v2097
    %v2103 = vadd.s32 %v2102, 127
    %v2104 = vshll.u32 %v2103, 23
    %v2105 = vor.u32 4788187, %v2104
    %v2106 = vand.u32 2147483647, %v2105
    %v2108 = vcvt.s32.f32 %v2101
    %v2109 = vmul.f32 %v2108, %v2106
    %v2110 = vxor.u32 %v2109, 2147483648
    %v2111 = vsel %vm2028, %v2110, %v2109
    %v2112 = vsub.s32 4, %v2088
    %v2113 = vsel %vm2028, %v2112, %v2088
    %v2114 = vsel %vm2027, %v1610, %v2111
    %v2115 = vsel %vm2027, 0, %v2113
    %v2116 = vcosq.f32.pop %v2114
    %v2117 = vsinq.f32.pop %v2114
    %vm2118 = vweird.f32 %v1610
    %v2119 = vand.u32 %v2115, 3
    %vm2120 = vcmp.lt.s32.totalorder %v2119, 2
    %vm2121 = vcmp.eq.s32.totalorder %v2119, 0
    %v2122 = vxor.u32 %v2117, 2147483648
    %v2123 = vsel %vm2121, %v2116, %v2122
    %vm2124 = vcmp.eq.s32.totalorder %v2119, 2
    %v2125 = vxor.u32 %v2116, 2147483648
    %v2126 = vsel %vm2124, %v2125, %v2117
    %v2127 = vsel %vm2120, %v2123, %v2126
    %v2128 = vsel %vm2118, nan, %v2127
    %v2129 = vand.u32 2147483647, %v1610
    %vm2130 = vcmp.le.f32.partialorder %v2129, 0.7853982
    %vm2131 = vcmp.lt.s32.totalorder %v1610, 0
    %v2132 = vand.u32 %v1610, 2139095040
    %v2133 = vshrl.u32 %v2132, 23
    %v2134 = vsub.s32 %v2133, 127
    %v2135 = vand.u32 2147483647, %v1610
    %v2136 = vand.u32 %v2135, 8388607
    %v2137 = vor.u32 %v2136, 8388608
    %v2138 = vsub.s32 0, %v2137
    %v2139 = vadd.s32 %v2134, 1
    %vm2140 = vcmp.gt.s32.totalorder %v2139, 0
    %v2141 = vsel %vm2140, %v2139, 0
    %v2142 = vshrl.u32 %v2141, 5
    %v2143 = vand.u32 %v2141, 31
    %v2144 = vsub.s32 32, %v2143
    %v2145 = vshrl.u32 683565275, %v2144
    %v2146 = vshll.u32 683565275, %v2143
    %v2147 = vshrl.u32 2475754826, %v2144
    %v2148 = vor.u32 %v2146, %v2147
    %v2149 = vshll.u32 2475754826, %v2143
    %v2150 = vshrl.u32 2131351028, %v2144
    %v2151 = vor.u32 %v2149, %v2150
    %v2152 = vshll.u32 2131351028, %v2143
    %v2153 = vshrl.u32 2102212464, %v2144
    %v2154 = vor.u32 %v2152, %v2153
    %v2155 = vshll.u32 2102212464, %v2143
    %v2156 = vshrl.u32 920167782, %v2144
    %v2157 = vor.u32 %v2155, %v2156
    %v2158 = vshll.u32 920167782, %v2143
    %v2159 = vshrl.u32 1326507024, %v2144
    %v2160 = vor.u32 %v2158, %v2159
    %vm2161 = vcmp.lt.s32.totalorder %v2142, 1
    %vm2162 = vcmp.lt.s32.totalorder %v2142, 2
    %vm2163 = vcmp.lt.s32.totalorder %v2142, 3
    %vm2164 = vcmp.lt.s32.totalorder %v2142, 4
    %v2165 = vsel %vm2161, %v2145, %v2148
    %v2166 = vsel %vm2164, %v2154, 2102212464
    %v2167 = vsel %vm2163, %v2151, %v2166
    %v2168 = vsel %vm2162, %v2165, %v2167
    %v2169 = vsel %vm2161, %v2148, %v2151
    %v2170 = vsel %vm2164, %v2157, 920167782
    %v2171 = vsel %vm2163, %v2154, %v2170
    %v2172 = vsel %vm2162, %v2169, %v2171
    %v2173 = vsel %vm2161, %v2151, %v2154
    %v2174 = vsel %vm2164, %v2160, 1326507024
    %v2175 = vsel %vm2163, %v2157, %v2174
    %v2176 = vsel %vm2162, %v2173, %v2175
    %v2177 = vshll.u32 %v2137, 8
    %v2178 = vmul.u32.u64.compose %v2177, %v2176
    %v2179 = vextract.low.u32 %v2178
    %v2180 = vextract.high.u32 %v2178
    %v2181 = vmul.u32.u64.compose %v2177, %v2172
    %v2182 = vextract.low.u32 %v2181
    %v2183 = vextract.high.u32 %v2181
    %v2184 = vmul.u32 %v2177, %v2168
    %v2185 = vadd.s32 %v2180, %v2182
    %vm2186 = vc.u32 %v2180, %v2182
    %v2187 = vadd.s32 %v2183, 1
    %v2188 = vsel %vm2186, %v2187, %v2183
    %v2189 = vadd.s32 %v2184, %v2188
    %v2190 = vadd.s32 %v2189, 536870912
    %v2191 = vshrl.u32 %v2190, 30
    %v2192 = vshll.u32 %v2191, 30
    %v2193 = vsub.s32 %v2189, %v2192
    %vm2194 = vcmp.lt.s32.totalorder %v2193, 0
    %v2195 = vsub.s32 0, %v2193
    %v2196 = vsel %vm2194, %v2195, %v2193
    %v2197 = vclz %v2196
    %v2198 = vsub.s32 %v2197, 2
    %vm2199 = vcmp.gt.s32.totalorder 0, %v2198
    %v2200 = vsel %vm2199, 0, %v2198
    %v2201 = vsub.s32 32, %v2200
    %v2202 = vshll.u32 %v2193, %v2200
    %v2203 = vshrl.u32 %v2185, %v2201
    %v2204 = vor.u32 %v2202, %v2203
    %v2205 = vsub.s32 4294967266, %v2200
    %v2206 = vadd.s32 %v2205, 127
    %v2207 = vshll.u32 %v2206, 23
    %v2208 = vor.u32 4788187, %v2207
    %v2209 = vand.u32 2147483647, %v2208
    %v2211 = vcvt.s32.f32 %v2204
    %v2212 = vmul.f32 %v2211, %v2209
    %v2213 = vxor.u32 %v2212, 2147483648
    %v2214 = vsel %vm2131, %v2213, %v2212
    %v2215 = vsub.s32 4, %v2191
    %v2216 = vsel %vm2131, %v2215, %v2191
    %v2217 = vsel %vm2130, %v1610, %v2214
    %v2218 = vsel %vm2130, 0, %v2216
    %v2219 = vcosq.f32.pop %v2217
    %v2220 = vsinq.f32.pop %v2217
    %vm2221 = vweird.f32 %v1610
    %v2222 = vadd.s32 %v2218, 3
    %v2223 = vand.u32 %v2222, 3
    %vm2224 = vcmp.lt.s32.totalorder %v2223, 2
    %vm2225 = vcmp.eq.s32.totalorder %v2223, 0
    %v2226 = vxor.u32 %v2220, 2147483648
    %v2227 = vsel %vm2225, %v2219, %v2226
    %vm2228 = vcmp.eq.s32.totalorder %v2223, 2
    %v2229 = vxor.u32 %v2219, 2147483648
    %v2230 = vsel %vm2228, %v2229, %v2220
    %v2231 = vsel %vm2224, %v2227, %v2230
    %v2232 = vsel %vm2221, nan, %v2231
    %v2233 = vmul.f32 %v1921, %v2128
    %v2234 = vmul.f32 %v2025, %v2232
    %v2235 = vsub.f32 %v2233, %v2234
    %v2236 = vmul.f32 %v2025, %v2128
    %v2237 = vmul.f32 %v1921, %v2232
    %v2238 = vadd.f32 %v2236, %v2237
    %v2239 = vsub.f32 0.0, %v2128
    %v2240 = vmul.f32 %v2239, %v1818
    %v2241 = vsub.f32 0.0, %v2232
    %v2242 = vmul.f32 %v2241, %v1818
    %v2243 = vmul.f32 %v1921, %v1818
    %v2244 = vmul.f32 %v2025, %v1818
    %v2245 = vmul.f32 %v2235, %v1714
    %v2246 = vmul.f32 %v2238, %v1714
    %v2247 = vmul.f32 %v1714, %v1279
    %v2248 = vmul.f32 %v2240, %v1591
    %v2249 = vmul.f32 %v2242, %v1592
    %v2250 = vsub.f32 %v2248, %v2249
    %v2251 = vadd.f32 %v2247, %v2250
    %v2252 = vmul.f32 %v1714, 0.0
    %v2253 = vmul.f32 %v2240, %v1592
    %v2254 = vmul.f32 %v2242, %v1591
    %v2255 = vadd.f32 %v2253, %v2254
    %v2256 = vadd.f32 %v2252, %v2255
    %v2257 = vmul.f32 %v2243, %v1279
    %v2258 = vmul.f32 %v2244, 0.0
    %v2259 = vsub.f32 %v2257, %v2258
    %v2260 = vmul.f32 %v2245, %v1591
    %v2261 = vmul.f32 %v2246, %v1592
    %v2262 = vsub.f32 %v2260, %v2261
    %v2263 = vadd.f32 %v2259, %v2262
    %v2264 = vmul.f32 %v2243, 0.0
    %v2265 = vmul.f32 %v2244, %v1279
    %v2266 = vadd.f32 %v2264, %v2265
    %v2267 = vmul.f32 %v2245, %v1592
    %v2268 = vmul.f32 %v2246, %v1591
    %v2269 = vadd.f32 %v2267, %v2268
    %v2270 = vadd.f32 %v2266, %v2269
    %v2271 = vmul.f32 %v2251, %v2251
    %v2272 = vmul.f32 %v2256, %v2256
    %v2273 = vadd.f32 %v2271, %v2272
    %v2274 = vmul.f32 %v2263, %v2263
    %v2275 = vmul.f32 %v2270, %v2270
    %v2276 = vadd.f32 %v2274, %v2275
    %v2277 = vmul.f32 %v2251, %v2263
    %v2278 = vmul.f32 %v2256, %v2270
    %v2279 = vadd.f32 %v2277, %v2278
    %v2280 = vmul.f32 %v2256, %v2263
    %v2281 = vmul.f32 %v2251, %v2270
    %v2282 = vsub.f32 %v2280, %v2281
    %v2283 = vsub.f32 0.0, %v2282
    %v2285 = vlaneseq
    %v2286 = vshrl.u32 %v2285, 7
    %v2287 = vsub.s32 0, %v2286
    %v2288 = vrot.slane %v1159, %v2287
    %v2291 = vlaneseq
    %v2292 = vshrl.u32 %v2291, 7
    %v2293 = vsub.s32 0, %v2292
    %v2294 = vrot.slane %v1156, %v2293
    %v2297 = vlaneseq
    %v2298 = vshrl.u32 %v2297, 7
    %v2299 = vsub.s32 0, %v2298
    %v2300 = vrot.slane %v1162, %v2299
    %v2303 = vlaneseq
    %v2304 = vshrl.u32 %v2303, 7
    %v2305 = vsub.s32 0, %v2304
    %v2306 = vrot.slane %v1163, %v2305
    %v2309 = vlaneseq
    %v2310 = vshrl.u32 %v2309, 7
    %v2311 = vsub.s32 0, %v2310
    %v2312 = vrot.slane %v2279, %v2311
    %v2315 = vlaneseq
    %v2316 = vshrl.u32 %v2315, 7
    %v2317 = vsub.s32 0, %v2316
    %v2318 = vrot.slane %v2276, %v2317
    %v2321 = vlaneseq
    %v2322 = vshrl.u32 %v2321, 7
    %v2323 = vsub.s32 0, %v2322
    %v2324 = vrot.slane %v2282, %v2323
    %v2327 = vlaneseq
    %v2328 = vshrl.u32 %v2327, 7
    %v2329 = vsub.s32 0, %v2328
    %v2330 = vrot.slane %v2283, %v2329
    %vm2332 = vcmask 1040384
    %v2333 = vsel %vm2332, %v1153, %v2288
    %vm2334 = vcmask 1041408
    %v2335 = vsel %vm2334, %v2333, %v2288
    %vm2336 = vcmask 1042432
    %v2337 = vsel %vm2336, %v2335, %v2294
    %vm2338 = vcmask 1043456
    %v2339 = vsel %vm2338, %v2337, 0.0
    %vm2340 = vcmask 1044480
    %v2341 = vsel %vm2340, %v2339, %v2300
    %vm2342 = vcmask 1045504
    %v2343 = vsel %vm2342, %v2341, %v2306
    %vm2344 = vcmask 1046528
    %v2345 = vsel %vm2344, %v2343, 0.0
    %v2346 = vsel %vm2332, %v2273, %v2312
    %v2347 = vsel %vm2334, %v2346, %v2312
    %v2348 = vsel %vm2336, %v2347, %v2318
    %v2349 = vsel %vm2338, %v2348, 0.0
    %v2350 = vsel %vm2340, %v2349, %v2324
    %v2351 = vsel %vm2342, %v2350, %v2330
    %v2352 = vsel %vm2344, %v2351, 0.0
    %2353 = vst [vmem:[%s3] sm:$0xff] %v2345
    %2354 = vst [vmem:[%s3 + $0x8] sm:$0xff] %v2352
    // Predicated region
    $region22: #{classifier_multiqubit_forward.1} parent=1 // pred_check
      _
    $region23: #{classifier_multiqubit_forward.1} parent=1 // pred_check_branch
      %2356 = sbr.rel (0) target = $region25
    $region24: #{classifier_multiqubit_forward.1} parent=1 // pred_region
      _
    $region25: #{classifier_multiqubit_forward.1} parent=1 // pred_fallthru
      _
    // Predicated region
    $region26: #{classifier_multiqubit_forward.1} parent=1 // pred_check
      _
    $region27: #{classifier_multiqubit_forward.1} parent=1 // pred_check_branch
      %2358 = sbr.rel (0) target = $region29
    $region28: #{classifier_multiqubit_forward.1} parent=1 // pred_region
      _
    $region29: #{classifier_multiqubit_forward.1} parent=1 // pred_fallthru
      _
    %2359 = vsyncpa [#allocation3], 1
    %2360 = vsyncpa [#allocation5], 1

</llo_original>
